<compile_context>
chip_gen: v7x
topology: tpu7x:2x2x1
jax: 0.10.0
libtpu: 0.0.40
codegen_flags: <defaults>
</compile_context>

<pallas_src>
import math
import functools

import jax
import jax.numpy as jnp
from jax.experimental import pallas as pl
from jax.experimental.pallas import tpu as pltpu

EPS = 1e-5                       # torch.nn.LayerNorm default eps
_SQRT_HALF = 0.7071067811865476  # 1/sqrt(2)


# ------------------------- in-kernel helpers -------------------------

def _ln(h, w, b):
    """LayerNorm over the last axis (biased variance).  h: (R, D), w/b: (1, D)."""
    mu = jnp.mean(h, axis=-1, keepdims=True)
    c = h - mu
    var = jnp.mean(c * c, axis=-1, keepdims=True)
    return c * jax.lax.rsqrt(var + EPS) * w + b


def _silu(h):
    return h / (1.0 + jnp.exp(-h))


def _erf(z):
    # Abramowitz & Stegun 7.1.26 rational approximation, |error| < 1.5e-7.
    # Gives torch.nn.GELU()'s exact-erf semantics without needing an erf
    # primitive in Mosaic (only exp / div / where are used).
    t = 1.0 / (1.0 + 0.3275911 * jnp.abs(z))
    poly = t * (0.254829592 + t * (-0.284496736 + t * (1.421413741
             + t * (-1.453152027 + t * 1.061405429))))
    e = 1.0 - poly * jnp.exp(-z * z)
    return jnp.where(z >= 0.0, e, -e)


def _gelu(h):
    return 0.5 * h * (1.0 + _erf(h * _SQRT_HALF))


def _mha(q, k, v, head_mask, head_dim):
    """Multi-head attention without per-head loops / lane concat.

    q: (Bb, Tq, D), k/v: (Bb, Tk, D) in f32; head_mask: (H, D) 0/1.
    Block-diagonal trick: the H per-head query blocks are stacked along rows
    (other heads' lanes zeroed), so one batched matmul over the full D
    contraction yields all heads' scores at once.
    """
    Bb, Tq, D = q.shape
    H = head_mask.shape[0]
    scale = 1.0 / math.sqrt(head_dim)        # folded into q once

    qh = (q * scale)[:, None, :, :] * head_mask[None, :, None, :]   # (Bb,H,Tq,D)
    qh = qh.reshape(Bb, H * Tq, D).astype(jnp.bfloat16)

    s = jnp.einsum("bqd,bkd->bqk", qh, k.astype(jnp.bfloat16),
                   preferred_element_type=jnp.float32)              # (Bb,H*Tq,Tk)
    s_max = jnp.max(s, axis=-1, keepdims=True)
    e = jnp.exp(s - s_max)
    p = e * pl.reciprocal(jnp.sum(e, axis=-1, keepdims=True), approx=True)

    o = jnp.einsum("bqk,bkd->bqd", p.astype(jnp.bfloat16), v.astype(jnp.bfloat16),
                   preferred_element_type=jnp.float32)              # (Bb,H*Tq,D)
    o = o.reshape(Bb, H, Tq, D) * head_mask[None, :, None, :]
    return jnp.sum(o, axis=1)                                       # (Bb,Tq,D)


# ------------------------- the kernel -------------------------

def decoder_block_kernel(x_ref, enc_ref, emb_ref,
                         ln_ref, attn_w_ref, f1w_ref, f1b_ref, f2w_ref,
                         se_w_ref, se_b_ref, so_w_ref, ob_ref,
                         o_ref, *, num_head):
    Bb, T, D = x_ref.shape
    S = enc_ref.shape[1]
    H = num_head
    hd = D // H
    R = Bb * T
    f32, bf16 = jnp.float32, jnp.bfloat16

    # ----- hoisted weight reads (each ref read exactly once) -----
    ln = ln_ref[...]              # (12, D) f32   LayerNorm weights/biases
    attn_w = attn_w_ref[...]      # (D, 6D) bf16  [sa_q|sa_k|sa_v|ca_q|ca_k|ca_v]
    f1w = f1w_ref[...]            # (D, FD) bf16
    f1b = f1b_ref[...]            # (1, FD) f32
    f2w = f2w_ref[...]            # (FD, D) bf16
    se_w = se_w_ref[...]          # (TE, 2D) bf16
    se_b = se_b_ref[...]          # (1, 2D) f32
    so_w = so_w_ref[...]          # (D, D) bf16
    ob = ob_ref[...]              # (2, D) f32
    f2b, so_b = ob[0:1, :], ob[1:2, :]

    x = x_ref[...].astype(f32).reshape(R, D)
    enc = enc_ref[...].astype(f32).reshape(Bb * S, D)
    emb = emb_ref[...].astype(f32)                       # (Bb, TE)

    # per-head lane ownership mask (H, D)
    lane = jax.lax.broadcasted_iota(jnp.int32, (H, D), 1)
    head = jax.lax.broadcasted_iota(jnp.int32, (H, D), 0)
    head_mask = ((lane >= head * hd) & (lane < (head + 1) * hd)).astype(f32)

    def mm(a, w):   # bf16 MXU inputs, f32 accumulation
        return jnp.dot(a.astype(bf16), w, preferred_element_type=f32)

    # ---------------- TemporalSelfAttention ----------------
    xn = _ln(x, ln[0:1], ln[1:2])
    qkv = mm(xn, attn_w[:, :3 * D])                      # fused QKV (R, 3D)
    q = qkv[:, :D].reshape(Bb, T, D)
    k = qkv[:, D:2 * D].reshape(Bb, T, D)
    v = qkv[:, 2 * D:].reshape(Bb, T, D)
    attn = _mha(q, k, v, head_mask, hd)
    x = x + attn.reshape(R, D)                           # dropout == identity
    x = _ln(x, ln[4:5], ln[5:6])                         # norm1

    # ---------------- TemporalCrossAttention ----------------
    xn = _ln(x, ln[2:3], ln[3:4])
    en = _ln(enc, ln[2:3], ln[3:4])                      # same norm params on enc_out
    q = mm(xn, attn_w[:, 3 * D:4 * D]).reshape(Bb, T, D)
    kv = mm(en, attn_w[:, 4 * D:])                       # fused K/V (Bb*S, 2D)
    k = kv[:, :D].reshape(Bb, S, D)
    v = kv[:, D:].reshape(Bb, S, D)
    ca = _mha(q, k, v, head_mask, hd)
    x = x + ca.reshape(R, D)                             # dropout == identity
    x = _ln(x, ln[6:7], ln[7:8])                         # norm2

    # ---------------- FFN + StylizationBlock ----------------
    h1 = mm(x, f1w) + f1b
    h1 = _gelu(h1)                                       # exact-erf GELU
    y = mm(h1, f2w) + f2b

    eo = mm(_silu(emb), se_w) + se_b                     # (Bb, 2D)
    scale = eo[:, :D].reshape(Bb, 1, D)
    shift = eo[:, D:].reshape(Bb, 1, D)
    hh = _ln(y, ln[10:11], ln[11:12]).reshape(Bb, T, D) * (1.0 + scale) + shift
    hh = mm(_silu(hh.reshape(R, D)), so_w) + so_b        # dropout == identity
    ffn_out = x + hh          # residual inside FFN.forward
    x = x + ffn_out           # block residual: 2x + hh, as in the PyTorch module
    x = _ln(x, ln[8:9], ln[9:10])                        # norm3

    o_ref[...] = x.reshape(Bb, T, D).astype(o_ref.dtype)


# ------------------------- wrapper -------------------------

def advanced_transformer_decoder_block(x, enc, emb, params, num_head,
                                        block_batch=None):
    B, T, D = x.shape
    S = enc.shape[1]
    TE = emb.shape[1]

    # Block several sequences per grid step so the row dim approaches 128.
    if block_batch is None:
        block_batch = min(B, max(1, 128 // T))
        while B % block_batch:
            block_batch -= 1
    Bb = block_batch

    # ----- pack the 26 original parameters into 9 operands -----
    ln = jnp.stack([params["sa_nw"], params["sa_nb"],
                    params["ca_nw"], params["ca_nb"],
                    params["n1w"], params["n1b"],
                    params["n2w"], params["n2b"],
                    params["n3w"], params["n3b"],
                    params["sn_w"], params["sn_b"]], axis=0).astype(jnp.float32)
    attn_w = jnp.concatenate(
        [params["sa_wq"], params["sa_wk"], params["sa_wv"],
         params["ca_wq"], params["ca_wk"], params["ca_wv"]],
        axis=1).astype(jnp.bfloat16)
    f1w = params["f1w"].astype(jnp.bfloat16)
    f1b = params["f1b"].reshape(1, -1).astype(jnp.float32)
    f2w = params["f2w"].astype(jnp.bfloat16)
    se_w = params["se_w"].astype(jnp.bfloat16)
    se_b = params["se_b"].reshape(1, -1).astype(jnp.float32)
    so_w = params["so_w"].astype(jnp.bfloat16)
    ob = jnp.stack([params["f2b"], params["so_b"]], axis=0).astype(jnp.float32)

    weights = [ln, attn_w, f1w, f1b, f2w, se_w, se_b, so_w, ob]

    def const_spec(a):
        return pl.BlockSpec(a.shape, lambda b, _n=a.ndim: (0,) * _n)

    in_specs = [
        pl.BlockSpec((Bb, T, D), lambda b: (b, 0, 0)),
        pl.BlockSpec((Bb, S, D), lambda b: (b, 0, 0)),
        pl.BlockSpec((Bb, TE), lambda b: (b, 0)),
    ] + [const_spec(w) for w in weights]

    # TODO(synk): for large D / FD (e.g. D>=1024, FD=4D) the FFN weights should be
    # tiled over an extra "arbitrary" grid axis (or kept in pl.ANY with manual DMA)
    # instead of being fully VMEM-resident -- important for v7x's 64 MiB VMEM.
    return pl.pallas_call(
        functools.partial(decoder_block_kernel, num_head=num_head),
        out_shape=jax.ShapeDtypeStruct((B, T, D), x.dtype),
        grid=(B // Bb,),
        in_specs=in_specs,
        out_specs=pl.BlockSpec((Bb, T, D), lambda b: (b, 0, 0)),
        compiler_params=pltpu.CompilerParams(dimension_semantics=("parallel",)),
    )(x, enc, emb, *weights)


# ------------------------- pure-JAX reference -------------------------

def _ln_ref(h, w, b):
    mu = jnp.mean(h, axis=-1, keepdims=True)
    var = jnp.mean((h - mu) ** 2, axis=-1, keepdims=True)
    return (h - mu) / jnp.sqrt(var + EPS) * w + b


def _mm_ref(a, b, bf16):
    if bf16:
        a = a.astype(jnp.bfloat16)
        b = b.astype(jnp.bfloat16)
    return jnp.dot(a, b, preferred_element_type=jnp.float32)


def _mha_ref(q, k, v, H, bf16):
    B, T, D = q.shape
    S = k.shape[1]
    hd = D // H
    q = q * (1.0 / math.sqrt(hd))      # scale folded into q (as in the kernel)
    qh = q.reshape(B, T, H, hd).transpose(0, 2, 1, 3)
    kh = k.reshape(B, S, H, hd).transpose(0, 2, 1, 3)
    vh = v.reshape(B, S, H, hd).transpose(0, 2, 1, 3)
    if bf16:
        qh, kh, vh = (t.astype(jnp.bfloat16) for t in (qh, kh, vh))
    s = jnp.einsum("bhtd,bhsd->bhts", qh, kh, preferred_element_type=jnp.float32)
    a = jax.nn.softmax(s, axis=-1)
    if bf16:
        a = a.astype(jnp.bfloat16)
    o = jnp.einsum("bhts,bhsd->bhtd", a, vh, preferred_element_type=jnp.float32)
    return o.transpose(0, 2, 1, 3).reshape(B, T, D)


def reference(x, enc, emb, p, H, bf16_matmul):
    """Mirror of the PyTorch block.  bf16_matmul=True emulates the kernel's
    precision policy (bf16 MXU inputs, f32 accumulation, f32 elementwise)."""
    D = x.shape[-1]
    mm = functools.partial(_mm_ref, bf16=bf16_matmul)
    # self-attn
    xn = _ln_ref(x, p["sa_nw"], p["sa_nb"])
    attn = _mha_ref(mm(xn, p["sa_wq"]), mm(xn, p["sa_wk"]), mm(xn, p["sa_wv"]),
                    H, bf16_matmul)
    x = _ln_ref(x + attn, p["n1w"], p["n1b"])
    # cross-attn
    xn = _ln_ref(x, p["ca_nw"], p["ca_nb"])
    en = _ln_ref(enc, p["ca_nw"], p["ca_nb"])
    ca = _mha_ref(mm(xn, p["ca_wq"]), mm(en, p["ca_wk"]), mm(en, p["ca_wv"]),
                  H, bf16_matmul)
    x = _ln_ref(x + ca, p["n2w"], p["n2b"])
    # FFN + stylization (exact erf GELU, like torch.nn.GELU())
    h1 = jax.nn.gelu(mm(x, p["f1w"]) + p["f1b"], approximate=False)
    y = mm(h1, p["f2w"]) + p["f2b"]
    eo = (mm(jax.nn.silu(emb), p["se_w"]) + p["se_b"])[:, None, :]
    scale, shift = eo[..., :D], eo[..., D:]
    hh = _ln_ref(y, p["sn_w"], p["sn_b"]) * (1.0 + scale) + shift
    hh = mm(jax.nn.silu(hh), p["so_w"]) + p["so_b"]
    ffn_out = x + hh
    x = _ln_ref(x + ffn_out, p["n3w"], p["n3b"])
    return x


# ------------------------- main -------------------------

if __name__ == "__main__":
    B, T, S, D, H, FD, TE = 2, 8, 8, 32, 4, 64, 32  # small shapes
    key = jax.random.PRNGKey(0)
    ks = iter(jax.random.split(key, 64))

    def rnd(shape, scale=0.1):
        return scale * jax.random.normal(next(ks), shape, jnp.float32)

    params = {
        # self-attn
        "sa_nw": 1.0 + rnd((D,)), "sa_nb": rnd((D,)),
        "sa_wq": rnd((D, D)), "sa_wk": rnd((D, D)), "sa_wv": rnd((D, D)),
        # cross-attn
        "ca_nw": 1.0 + rnd((D,)), "ca_nb": rnd((D,)),
        "ca_wq": rnd((D, D)), "ca_wk": rnd((D, D)), "ca_wv": rnd((D, D)),
        # block norms
        "n1w": 1.0 + rnd((D,)), "n1b": rnd((D,)),
        "n2w": 1.0 + rnd((D,)), "n2b": rnd((D,)),
        "n3w": 1.0 + rnd((D,)), "n3b": rnd((D,)),
        # FFN.  linear2 / stylization out are zero_module()'d at PyTorch init;
        # we use non-zero values here so the GELU + stylization path (the
        # trained-weights case) is actually exercised by the check.
        "f1w": rnd((D, FD)), "f1b": rnd((FD,)),
        "f2w": rnd((FD, D)), "f2b": rnd((D,)),
        # StylizationBlock
        "se_w": rnd((TE, 2 * D)), "se_b": rnd((2 * D,)),
        "sn_w": 1.0 + rnd((D,)), "sn_b": rnd((D,)),
        "so_w": rnd((D, D)), "so_b": rnd((D,)),
    }

    x = jax.random.normal(next(ks), (B, T, D), jnp.float32)
    enc = jax.random.normal(next(ks), (B, S, D), jnp.float32)
    emb = jax.random.normal(next(ks), (B, TE), jnp.float32)

    out = advanced_transformer_decoder_block(x, enc, emb, params, H)
    out = jax.block_until_ready(out)
    assert out.shape == (B, T, D)

    # 1) Matched-precision reference (bf16 MXU inputs, f32 accumulation).
    #    Tolerance budget: EUP approximate-reciprocal softmax + op-ordering.
    ref_b = reference(x, enc, emb, params, H, bf16_matmul=True)
    err_b = float(jnp.max(jnp.abs(out - ref_b)))
    assert jnp.allclose(out, ref_b, atol=1e-2, rtol=1e-2), err_b

    # 2) Full-f32 module reference; looser bound covers bf16 MXU quantization.
    ref_f = reference(x, enc, emb, params, H, bf16_matmul=False)
    err_f = float(jnp.max(jnp.abs(out - ref_f)))
    assert jnp.allclose(out, ref_f, atol=5e-2, rtol=5e-2), err_f

    print("KERNEL_OK")
</pallas_src>

<mosaic_0001>
module attributes {stable_mosaic.version = 11 : i64} {
  func.func @decoder_block_kernel(%arg0: i32, %arg1: memref<2x8x32xf32, #tpu.memory_space<vmem>>, %arg2: memref<2x8x32xf32, #tpu.memory_space<vmem>>, %arg3: memref<2x32xf32, #tpu.memory_space<vmem>>, %arg4: memref<12x32xf32, #tpu.memory_space<vmem>>, %arg5: memref<32x192xbf16, #tpu.memory_space<vmem>>, %arg6: memref<32x64xbf16, #tpu.memory_space<vmem>>, %arg7: memref<1x64xf32, #tpu.memory_space<vmem>>, %arg8: memref<64x32xbf16, #tpu.memory_space<vmem>>, %arg9: memref<32x64xbf16, #tpu.memory_space<vmem>>, %arg10: memref<1x64xf32, #tpu.memory_space<vmem>>, %arg11: memref<32x32xbf16, #tpu.memory_space<vmem>>, %arg12: memref<2x32xf32, #tpu.memory_space<vmem>>, %arg13: memref<2x8x32xf32, #tpu.memory_space<vmem>>) attributes {dimension_semantics = [#tpu.dimension_semantics<parallel>], iteration_bounds = array<i64: 1>, scalar_prefetch = 0 : i64, scratch_operands = 0 : i64, tpu.core_type = #tpu.core_type<tc>, window_params = [{transform_indices = @transform_0, window_bounds = array<i64: 2, 8, 32>}, {transform_indices = @transform_1, window_bounds = array<i64: 2, 8, 32>}, {transform_indices = @transform_2, window_bounds = array<i64: 2, 32>}, {pipeline_mode = #tpu.pipeline_mode<synchronous>, transform_indices = @transform_3, window_bounds = array<i64: 12, 32>}, {pipeline_mode = #tpu.pipeline_mode<synchronous>, transform_indices = @transform_4, window_bounds = array<i64: 32, 192>}, {pipeline_mode = #tpu.pipeline_mode<synchronous>, transform_indices = @transform_5, window_bounds = array<i64: 32, 64>}, {pipeline_mode = #tpu.pipeline_mode<synchronous>, transform_indices = @transform_6, window_bounds = array<i64: 1, 64>}, {pipeline_mode = #tpu.pipeline_mode<synchronous>, transform_indices = @transform_7, window_bounds = array<i64: 64, 32>}, {pipeline_mode = #tpu.pipeline_mode<synchronous>, transform_indices = @transform_8, window_bounds = array<i64: 32, 64>}, {pipeline_mode = #tpu.pipeline_mode<synchronous>, transform_indices = @transform_9, window_bounds = array<i64: 1, 64>}, {pipeline_mode = #tpu.pipeline_mode<synchronous>, transform_indices = @transform_10, window_bounds = array<i64: 32, 32>}, {pipeline_mode = #tpu.pipeline_mode<synchronous>, transform_indices = @transform_11, window_bounds = array<i64: 2, 32>}, {transform_indices = @transform_12, window_bounds = array<i64: 2, 8, 32>}]} {
    %c0 = arith.constant 0 : index
    %c0_0 = arith.constant 0 : index
    %0 = vector.load %arg4[%c0, %c0_0] : memref<12x32xf32, #tpu.memory_space<vmem>>, vector<12x32xf32>
    %c0_1 = arith.constant 0 : index
    %c0_2 = arith.constant 0 : index
    %1 = vector.load %arg5[%c0_1, %c0_2] : memref<32x192xbf16, #tpu.memory_space<vmem>>, vector<32x192xbf16>
    %c0_3 = arith.constant 0 : index
    %c0_4 = arith.constant 0 : index
    %2 = vector.load %arg6[%c0_3, %c0_4] : memref<32x64xbf16, #tpu.memory_space<vmem>>, vector<32x64xbf16>
    %c0_5 = arith.constant 0 : index
    %c0_6 = arith.constant 0 : index
    %3 = vector.load %arg7[%c0_5, %c0_6] : memref<1x64xf32, #tpu.memory_space<vmem>>, vector<1x64xf32>
    %c0_7 = arith.constant 0 : index
    %c0_8 = arith.constant 0 : index
    %4 = vector.load %arg8[%c0_7, %c0_8] : memref<64x32xbf16, #tpu.memory_space<vmem>>, vector<64x32xbf16>
    %c0_9 = arith.constant 0 : index
    %c0_10 = arith.constant 0 : index
    %5 = vector.load %arg9[%c0_9, %c0_10] : memref<32x64xbf16, #tpu.memory_space<vmem>>, vector<32x64xbf16>
    %c0_11 = arith.constant 0 : index
    %c0_12 = arith.constant 0 : index
    %6 = vector.load %arg10[%c0_11, %c0_12] : memref<1x64xf32, #tpu.memory_space<vmem>>, vector<1x64xf32>
    %c0_13 = arith.constant 0 : index
    %c0_14 = arith.constant 0 : index
    %7 = vector.load %arg11[%c0_13, %c0_14] : memref<32x32xbf16, #tpu.memory_space<vmem>>, vector<32x32xbf16>
    %c0_15 = arith.constant 0 : index
    %c0_16 = arith.constant 0 : index
    %8 = vector.load %arg12[%c0_15, %c0_16] : memref<2x32xf32, #tpu.memory_space<vmem>>, vector<2x32xf32>
    %9 = vector.extract_strided_slice %8 {offsets = [0, 0], sizes = [1, 32], strides = [1, 1]} : vector<2x32xf32> to vector<1x32xf32>
    %10 = vector.extract_strided_slice %8 {offsets = [1, 0], sizes = [1, 32], strides = [1, 1]} : vector<2x32xf32> to vector<1x32xf32>
    %c0_17 = arith.constant 0 : index
    %c0_18 = arith.constant 0 : index
    %c0_19 = arith.constant 0 : index
    %11 = vector.load %arg1[%c0_17, %c0_18, %c0_19] : memref<2x8x32xf32, #tpu.memory_space<vmem>>, vector<2x8x32xf32>
    %12 = vector.shape_cast %11 : vector<2x8x32xf32> to vector<16x32xf32>
    %c0_20 = arith.constant 0 : index
    %c0_21 = arith.constant 0 : index
    %c0_22 = arith.constant 0 : index
    %13 = vector.load %arg2[%c0_20, %c0_21, %c0_22] : memref<2x8x32xf32, #tpu.memory_space<vmem>>, vector<2x8x32xf32>
    %14 = vector.shape_cast %13 : vector<2x8x32xf32> to vector<16x32xf32>
    %c0_23 = arith.constant 0 : index
    %c0_24 = arith.constant 0 : index
    %15 = vector.load %arg3[%c0_23, %c0_24] : memref<2x32xf32, #tpu.memory_space<vmem>>, vector<2x32xf32>
    %16 = tpu.iota {dimensions = array<i32: 1>} : vector<4x32xi32>
    %17 = tpu.iota {dimensions = array<i32: 0>} : vector<4x32xi32>
    %c8_i32 = arith.constant 8 : i32
    %18 = vector.broadcast %c8_i32 : i32 to vector<4x32xi32>
    %19 = arith.muli %17, %18 : vector<4x32xi32>
    %20 = arith.cmpi sge, %16, %19 : vector<4x32xi32>
    %c1_i32 = arith.constant 1 : i32
    %21 = vector.broadcast %c1_i32 : i32 to vector<4x32xi32>
    %22 = arith.addi %17, %21 : vector<4x32xi32>
    %c8_i32_25 = arith.constant 8 : i32
    %23 = vector.broadcast %c8_i32_25 : i32 to vector<4x32xi32>
    %24 = arith.muli %22, %23 : vector<4x32xi32>
    %25 = arith.cmpi slt, %16, %24 : vector<4x32xi32>
    %26 = arith.andi %20, %25 : vector<4x32xi1>
    %27 = arith.extui %26 : vector<4x32xi1> to vector<4x32xi32>
    %28 = arith.sitofp %27 : vector<4x32xi32> to vector<4x32xf32>
    %29 = vector.extract_strided_slice %0 {offsets = [0, 0], sizes = [1, 32], strides = [1, 1]} : vector<12x32xf32> to vector<1x32xf32>
    %30 = vector.extract_strided_slice %0 {offsets = [1, 0], sizes = [1, 32], strides = [1, 1]} : vector<12x32xf32> to vector<1x32xf32>
    %cst = arith.constant dense<0.000000e+00> : vector<16xf32>
    %31 = vector.multi_reduction <add>, %12, %cst [1] : vector<16x32xf32> to vector<16xf32>
    %32 = vector.shape_cast %31 : vector<16xf32> to vector<16x1xf32>
    %cst_26 = arith.constant 3.200000e+01 : f32
    %33 = vector.broadcast %cst_26 : f32 to vector<16x1xf32>
    %34 = arith.divf %32, %33 : vector<16x1xf32>
    %35 = vector.broadcast %34 : vector<16x1xf32> to vector<16x32xf32>
    %36 = arith.subf %12, %35 : vector<16x32xf32>
    %37 = arith.mulf %36, %36 : vector<16x32xf32>
    %cst_27 = arith.constant dense<0.000000e+00> : vector<16xf32>
    %38 = vector.multi_reduction <add>, %37, %cst_27 [1] : vector<16x32xf32> to vector<16xf32>
    %39 = vector.shape_cast %38 : vector<16xf32> to vector<16x1xf32>
    %cst_28 = arith.constant 3.200000e+01 : f32
    %40 = vector.broadcast %cst_28 : f32 to vector<16x1xf32>
    %41 = arith.divf %39, %40 : vector<16x1xf32>
    %cst_29 = arith.constant 9.99999974E-6 : f32
    %42 = vector.broadcast %cst_29 : f32 to vector<16x1xf32>
    %43 = arith.addf %41, %42 : vector<16x1xf32>
    %44 = math.rsqrt %43 : vector<16x1xf32>
    %45 = vector.broadcast %44 : vector<16x1xf32> to vector<16x32xf32>
    %46 = arith.mulf %36, %45 : vector<16x32xf32>
    %47 = vector.broadcast %29 : vector<1x32xf32> to vector<16x32xf32>
    %48 = arith.mulf %46, %47 : vector<16x32xf32>
    %49 = vector.broadcast %30 : vector<1x32xf32> to vector<16x32xf32>
    %50 = arith.addf %48, %49 : vector<16x32xf32>
    %51 = vector.extract_strided_slice %1 {offsets = [0, 0], sizes = [32, 96], strides = [1, 1]} : vector<32x192xbf16> to vector<32x96xbf16>
    %52 = arith.truncf %50 : vector<16x32xf32> to vector<16x32xbf16>
    %cst_30 = arith.constant dense<0.000000e+00> : vector<16x96xf32>
    %53 = tpu.matmul %52, %51, %cst_30 {dimension_numbers = #tpu.dot_dimension_numbers<[1], [0], [0], [1], [0, 0, 1, 1], [], []>} : vector<16x32xbf16>, vector<32x96xbf16>, vector<16x96xf32> -> vector<16x96xf32>
    %54 = vector.extract_strided_slice %53 {offsets = [0, 0], sizes = [16, 32], strides = [1, 1]} : vector<16x96xf32> to vector<16x32xf32>
    %55 = vector.shape_cast %54 : vector<16x32xf32> to vector<2x8x32xf32>
    %56 = vector.extract_strided_slice %53 {offsets = [0, 32], sizes = [16, 32], strides = [1, 1]} : vector<16x96xf32> to vector<16x32xf32>
    %57 = vector.shape_cast %56 : vector<16x32xf32> to vector<2x8x32xf32>
    %58 = vector.extract_strided_slice %53 {offsets = [0, 64], sizes = [16, 32], strides = [1, 1]} : vector<16x96xf32> to vector<16x32xf32>
    %59 = vector.shape_cast %58 : vector<16x32xf32> to vector<2x8x32xf32>
    %cst_31 = arith.constant 0.353553385 : f32
    %60 = vector.broadcast %cst_31 : f32 to vector<2x8x32xf32>
    %61 = arith.mulf %55, %60 : vector<2x8x32xf32>
    %62 = vector.shape_cast %61 : vector<2x8x32xf32> to vector<2x1x8x32xf32>
    %63 = vector.shape_cast %28 : vector<4x32xf32> to vector<1x4x1x32xf32>
    %64 = vector.broadcast %62 : vector<2x1x8x32xf32> to vector<2x4x8x32xf32>
    %65 = vector.broadcast %63 : vector<1x4x1x32xf32> to vector<2x4x8x32xf32>
    %66 = arith.mulf %64, %65 : vector<2x4x8x32xf32>
    %67 = vector.shape_cast %66 : vector<2x4x8x32xf32> to vector<2x32x32xf32>
    %68 = arith.truncf %67 : vector<2x32x32xf32> to vector<2x32x32xbf16>
    %69 = arith.truncf %57 : vector<2x8x32xf32> to vector<2x8x32xbf16>
    "tpu.trace_start"() <{level = 10 : i32, message = "bqd,bkd->bqk"}> : () -> ()
    %cst_32 = arith.constant dense<0.000000e+00> : vector<2x32x8xf32>
    %70 = tpu.matmul %68, %69, %cst_32 {dimension_numbers = #tpu.dot_dimension_numbers<[2], [2], [1], [1], [0, 0, 0, 1, 1, 1], [0], [0]>} : vector<2x32x32xbf16>, vector<2x8x32xbf16>, vector<2x32x8xf32> -> vector<2x32x8xf32>
    "tpu.trace_stop"() : () -> ()
    %cst_33 = arith.constant dense<0xFF800000> : vector<2x32xf32>
    %71 = vector.multi_reduction <maximumf>, %70, %cst_33 [2] : vector<2x32x8xf32> to vector<2x32xf32>
    %72 = vector.shape_cast %71 : vector<2x32xf32> to vector<2x32x1xf32>
    %73 = vector.broadcast %72 : vector<2x32x1xf32> to vector<2x32x8xf32>
    %74 = arith.subf %70, %73 : vector<2x32x8xf32>
    %75 = math.exp %74 : vector<2x32x8xf32>
    %cst_34 = arith.constant dense<0.000000e+00> : vector<2x32xf32>
    %76 = vector.multi_reduction <add>, %75, %cst_34 [2] : vector<2x32x8xf32> to vector<2x32xf32>
    %77 = vector.shape_cast %76 : vector<2x32xf32> to vector<2x32x1xf32>
    %78 = tpu.reciprocal %77 {approx = true} : vector<2x32x1xf32> -> vector<2x32x1xf32>
    %79 = vector.broadcast %78 : vector<2x32x1xf32> to vector<2x32x8xf32>
    %80 = arith.mulf %75, %79 : vector<2x32x8xf32>
    %81 = arith.truncf %80 : vector<2x32x8xf32> to vector<2x32x8xbf16>
    %82 = arith.truncf %59 : vector<2x8x32xf32> to vector<2x8x32xbf16>
    "tpu.trace_start"() <{level = 10 : i32, message = "bqk,bkd->bqd"}> : () -> ()
    %cst_35 = arith.constant dense<0.000000e+00> : vector<2x32x32xf32>
    %83 = tpu.matmul %81, %82, %cst_35 {dimension_numbers = #tpu.dot_dimension_numbers<[2], [1], [1], [2], [0, 0, 0, 1, 1, 2], [0], [0]>} : vector<2x32x8xbf16>, vector<2x8x32xbf16>, vector<2x32x32xf32> -> vector<2x32x32xf32>
    "tpu.trace_stop"() : () -> ()
    %84 = vector.shape_cast %83 : vector<2x32x32xf32> to vector<2x4x8x32xf32>
    %85 = vector.shape_cast %28 : vector<4x32xf32> to vector<1x4x1x32xf32>
    %86 = vector.broadcast %85 : vector<1x4x1x32xf32> to vector<2x4x8x32xf32>
    %87 = arith.mulf %84, %86 : vector<2x4x8x32xf32>
    %cst_36 = arith.constant dense<0.000000e+00> : vector<2x8x32xf32>
    %88 = vector.multi_reduction <add>, %87, %cst_36 [1] : vector<2x4x8x32xf32> to vector<2x8x32xf32>
    %89 = vector.shape_cast %88 : vector<2x8x32xf32> to vector<16x32xf32>
    %90 = arith.addf %12, %89 : vector<16x32xf32>
    %91 = vector.extract_strided_slice %0 {offsets = [4, 0], sizes = [1, 32], strides = [1, 1]} : vector<12x32xf32> to vector<1x32xf32>
    %92 = vector.extract_strided_slice %0 {offsets = [5, 0], sizes = [1, 32], strides = [1, 1]} : vector<12x32xf32> to vector<1x32xf32>
    %cst_37 = arith.constant dense<0.000000e+00> : vector<16xf32>
    %93 = vector.multi_reduction <add>, %90, %cst_37 [1] : vector<16x32xf32> to vector<16xf32>
    %94 = vector.shape_cast %93 : vector<16xf32> to vector<16x1xf32>
    %cst_38 = arith.constant 3.200000e+01 : f32
    %95 = vector.broadcast %cst_38 : f32 to vector<16x1xf32>
    %96 = arith.divf %94, %95 : vector<16x1xf32>
    %97 = vector.broadcast %96 : vector<16x1xf32> to vector<16x32xf32>
    %98 = arith.subf %90, %97 : vector<16x32xf32>
    %99 = arith.mulf %98, %98 : vector<16x32xf32>
    %cst_39 = arith.constant dense<0.000000e+00> : vector<16xf32>
    %100 = vector.multi_reduction <add>, %99, %cst_39 [1] : vector<16x32xf32> to vector<16xf32>
    %101 = vector.shape_cast %100 : vector<16xf32> to vector<16x1xf32>
    %cst_40 = arith.constant 3.200000e+01 : f32
    %102 = vector.broadcast %cst_40 : f32 to vector<16x1xf32>
    %103 = arith.divf %101, %102 : vector<16x1xf32>
    %cst_41 = arith.constant 9.99999974E-6 : f32
    %104 = vector.broadcast %cst_41 : f32 to vector<16x1xf32>
    %105 = arith.addf %103, %104 : vector<16x1xf32>
    %106 = math.rsqrt %105 : vector<16x1xf32>
    %107 = vector.broadcast %106 : vector<16x1xf32> to vector<16x32xf32>
    %108 = arith.mulf %98, %107 : vector<16x32xf32>
    %109 = vector.broadcast %91 : vector<1x32xf32> to vector<16x32xf32>
    %110 = arith.mulf %108, %109 : vector<16x32xf32>
    %111 = vector.broadcast %92 : vector<1x32xf32> to vector<16x32xf32>
    %112 = arith.addf %110, %111 : vector<16x32xf32>
    %113 = vector.extract_strided_slice %0 {offsets = [2, 0], sizes = [1, 32], strides = [1, 1]} : vector<12x32xf32> to vector<1x32xf32>
    %114 = vector.extract_strided_slice %0 {offsets = [3, 0], sizes = [1, 32], strides = [1, 1]} : vector<12x32xf32> to vector<1x32xf32>
    %cst_42 = arith.constant dense<0.000000e+00> : vector<16xf32>
    %115 = vector.multi_reduction <add>, %112, %cst_42 [1] : vector<16x32xf32> to vector<16xf32>
    %116 = vector.shape_cast %115 : vector<16xf32> to vector<16x1xf32>
    %cst_43 = arith.constant 3.200000e+01 : f32
    %117 = vector.broadcast %cst_43 : f32 to vector<16x1xf32>
    %118 = arith.divf %116, %117 : vector<16x1xf32>
    %119 = vector.broadcast %118 : vector<16x1xf32> to vector<16x32xf32>
    %120 = arith.subf %112, %119 : vector<16x32xf32>
    %121 = arith.mulf %120, %120 : vector<16x32xf32>
    %cst_44 = arith.constant dense<0.000000e+00> : vector<16xf32>
    %122 = vector.multi_reduction <add>, %121, %cst_44 [1] : vector<16x32xf32> to vector<16xf32>
    %123 = vector.shape_cast %122 : vector<16xf32> to vector<16x1xf32>
    %cst_45 = arith.constant 3.200000e+01 : f32
    %124 = vector.broadcast %cst_45 : f32 to vector<16x1xf32>
    %125 = arith.divf %123, %124 : vector<16x1xf32>
    %cst_46 = arith.constant 9.99999974E-6 : f32
    %126 = vector.broadcast %cst_46 : f32 to vector<16x1xf32>
    %127 = arith.addf %125, %126 : vector<16x1xf32>
    %128 = math.rsqrt %127 : vector<16x1xf32>
    %129 = vector.broadcast %128 : vector<16x1xf32> to vector<16x32xf32>
    %130 = arith.mulf %120, %129 : vector<16x32xf32>
    %131 = vector.broadcast %113 : vector<1x32xf32> to vector<16x32xf32>
    %132 = arith.mulf %130, %131 : vector<16x32xf32>
    %133 = vector.broadcast %114 : vector<1x32xf32> to vector<16x32xf32>
    %134 = arith.addf %132, %133 : vector<16x32xf32>
    %135 = vector.extract_strided_slice %0 {offsets = [2, 0], sizes = [1, 32], strides = [1, 1]} : vector<12x32xf32> to vector<1x32xf32>
    %136 = vector.extract_strided_slice %0 {offsets = [3, 0], sizes = [1, 32], strides = [1, 1]} : vector<12x32xf32> to vector<1x32xf32>
    %cst_47 = arith.constant dense<0.000000e+00> : vector<16xf32>
    %137 = vector.multi_reduction <add>, %14, %cst_47 [1] : vector<16x32xf32> to vector<16xf32>
    %138 = vector.shape_cast %137 : vector<16xf32> to vector<16x1xf32>
    %cst_48 = arith.constant 3.200000e+01 : f32
    %139 = vector.broadcast %cst_48 : f32 to vector<16x1xf32>
    %140 = arith.divf %138, %139 : vector<16x1xf32>
    %141 = vector.broadcast %140 : vector<16x1xf32> to vector<16x32xf32>
    %142 = arith.subf %14, %141 : vector<16x32xf32>
    %143 = arith.mulf %142, %142 : vector<16x32xf32>
    %cst_49 = arith.constant dense<0.000000e+00> : vector<16xf32>
    %144 = vector.multi_reduction <add>, %143, %cst_49 [1] : vector<16x32xf32> to vector<16xf32>
    %145 = vector.shape_cast %144 : vector<16xf32> to vector<16x1xf32>
    %cst_50 = arith.constant 3.200000e+01 : f32
    %146 = vector.broadcast %cst_50 : f32 to vector<16x1xf32>
    %147 = arith.divf %145, %146 : vector<16x1xf32>
    %cst_51 = arith.constant 9.99999974E-6 : f32
    %148 = vector.broadcast %cst_51 : f32 to vector<16x1xf32>
    %149 = arith.addf %147, %148 : vector<16x1xf32>
    %150 = math.rsqrt %149 : vector<16x1xf32>
    %151 = vector.broadcast %150 : vector<16x1xf32> to vector<16x32xf32>
    %152 = arith.mulf %142, %151 : vector<16x32xf32>
    %153 = vector.broadcast %135 : vector<1x32xf32> to vector<16x32xf32>
    %154 = arith.mulf %152, %153 : vector<16x32xf32>
    %155 = vector.broadcast %136 : vector<1x32xf32> to vector<16x32xf32>
    %156 = arith.addf %154, %155 : vector<16x32xf32>
    %157 = vector.extract_strided_slice %1 {offsets = [0, 96], sizes = [32, 32], strides = [1, 1]} : vector<32x192xbf16> to vector<32x32xbf16>
    %158 = arith.truncf %134 : vector<16x32xf32> to vector<16x32xbf16>
    %cst_52 = arith.constant dense<0.000000e+00> : vector<16x32xf32>
    %159 = tpu.matmul %158, %157, %cst_52 {dimension_numbers = #tpu.dot_dimension_numbers<[1], [0], [0], [1], [0, 0, 1, 1], [], []>} : vector<16x32xbf16>, vector<32x32xbf16>, vector<16x32xf32> -> vector<16x32xf32>
    %160 = vector.shape_cast %159 : vector<16x32xf32> to vector<2x8x32xf32>
    %161 = vector.extract_strided_slice %1 {offsets = [0, 128], sizes = [32, 64], strides = [1, 1]} : vector<32x192xbf16> to vector<32x64xbf16>
    %162 = arith.truncf %156 : vector<16x32xf32> to vector<16x32xbf16>
    %cst_53 = arith.constant dense<0.000000e+00> : vector<16x64xf32>
    %163 = tpu.matmul %162, %161, %cst_53 {dimension_numbers = #tpu.dot_dimension_numbers<[1], [0], [0], [1], [0, 0, 1, 1], [], []>} : vector<16x32xbf16>, vector<32x64xbf16>, vector<16x64xf32> -> vector<16x64xf32>
    %164 = vector.extract_strided_slice %163 {offsets = [0, 0], sizes = [16, 32], strides = [1, 1]} : vector<16x64xf32> to vector<16x32xf32>
    %165 = vector.shape_cast %164 : vector<16x32xf32> to vector<2x8x32xf32>
    %166 = vector.extract_strided_slice %163 {offsets = [0, 32], sizes = [16, 32], strides = [1, 1]} : vector<16x64xf32> to vector<16x32xf32>
    %167 = vector.shape_cast %166 : vector<16x32xf32> to vector<2x8x32xf32>
    %cst_54 = arith.constant 0.353553385 : f32
    %168 = vector.broadcast %cst_54 : f32 to vector<2x8x32xf32>
    %169 = arith.mulf %160, %168 : vector<2x8x32xf32>
    %170 = vector.shape_cast %169 : vector<2x8x32xf32> to vector<2x1x8x32xf32>
    %171 = vector.shape_cast %28 : vector<4x32xf32> to vector<1x4x1x32xf32>
    %172 = vector.broadcast %170 : vector<2x1x8x32xf32> to vector<2x4x8x32xf32>
    %173 = vector.broadcast %171 : vector<1x4x1x32xf32> to vector<2x4x8x32xf32>
    %174 = arith.mulf %172, %173 : vector<2x4x8x32xf32>
    %175 = vector.shape_cast %174 : vector<2x4x8x32xf32> to vector<2x32x32xf32>
    %176 = arith.truncf %175 : vector<2x32x32xf32> to vector<2x32x32xbf16>
    %177 = arith.truncf %165 : vector<2x8x32xf32> to vector<2x8x32xbf16>
    "tpu.trace_start"() <{level = 10 : i32, message = "bqd,bkd->bqk"}> : () -> ()
    %cst_55 = arith.constant dense<0.000000e+00> : vector<2x32x8xf32>
    %178 = tpu.matmul %176, %177, %cst_55 {dimension_numbers = #tpu.dot_dimension_numbers<[2], [2], [1], [1], [0, 0, 0, 1, 1, 1], [0], [0]>} : vector<2x32x32xbf16>, vector<2x8x32xbf16>, vector<2x32x8xf32> -> vector<2x32x8xf32>
    "tpu.trace_stop"() : () -> ()
    %cst_56 = arith.constant dense<0xFF800000> : vector<2x32xf32>
    %179 = vector.multi_reduction <maximumf>, %178, %cst_56 [2] : vector<2x32x8xf32> to vector<2x32xf32>
    %180 = vector.shape_cast %179 : vector<2x32xf32> to vector<2x32x1xf32>
    %181 = vector.broadcast %180 : vector<2x32x1xf32> to vector<2x32x8xf32>
    %182 = arith.subf %178, %181 : vector<2x32x8xf32>
    %183 = math.exp %182 : vector<2x32x8xf32>
    %cst_57 = arith.constant dense<0.000000e+00> : vector<2x32xf32>
    %184 = vector.multi_reduction <add>, %183, %cst_57 [2] : vector<2x32x8xf32> to vector<2x32xf32>
    %185 = vector.shape_cast %184 : vector<2x32xf32> to vector<2x32x1xf32>
    %186 = tpu.reciprocal %185 {approx = true} : vector<2x32x1xf32> -> vector<2x32x1xf32>
    %187 = vector.broadcast %186 : vector<2x32x1xf32> to vector<2x32x8xf32>
    %188 = arith.mulf %183, %187 : vector<2x32x8xf32>
    %189 = arith.truncf %188 : vector<2x32x8xf32> to vector<2x32x8xbf16>
    %190 = arith.truncf %167 : vector<2x8x32xf32> to vector<2x8x32xbf16>
    "tpu.trace_start"() <{level = 10 : i32, message = "bqk,bkd->bqd"}> : () -> ()
    %cst_58 = arith.constant dense<0.000000e+00> : vector<2x32x32xf32>
    %191 = tpu.matmul %189, %190, %cst_58 {dimension_numbers = #tpu.dot_dimension_numbers<[2], [1], [1], [2], [0, 0, 0, 1, 1, 2], [0], [0]>} : vector<2x32x8xbf16>, vector<2x8x32xbf16>, vector<2x32x32xf32> -> vector<2x32x32xf32>
    "tpu.trace_stop"() : () -> ()
    %192 = vector.shape_cast %191 : vector<2x32x32xf32> to vector<2x4x8x32xf32>
    %193 = vector.shape_cast %28 : vector<4x32xf32> to vector<1x4x1x32xf32>
    %194 = vector.broadcast %193 : vector<1x4x1x32xf32> to vector<2x4x8x32xf32>
    %195 = arith.mulf %192, %194 : vector<2x4x8x32xf32>
    %cst_59 = arith.constant dense<0.000000e+00> : vector<2x8x32xf32>
    %196 = vector.multi_reduction <add>, %195, %cst_59 [1] : vector<2x4x8x32xf32> to vector<2x8x32xf32>
    %197 = vector.shape_cast %196 : vector<2x8x32xf32> to vector<16x32xf32>
    %198 = arith.addf %112, %197 : vector<16x32xf32>
    %199 = vector.extract_strided_slice %0 {offsets = [6, 0], sizes = [1, 32], strides = [1, 1]} : vector<12x32xf32> to vector<1x32xf32>
    %200 = vector.extract_strided_slice %0 {offsets = [7, 0], sizes = [1, 32], strides = [1, 1]} : vector<12x32xf32> to vector<1x32xf32>
    %cst_60 = arith.constant dense<0.000000e+00> : vector<16xf32>
    %201 = vector.multi_reduction <add>, %198, %cst_60 [1] : vector<16x32xf32> to vector<16xf32>
    %202 = vector.shape_cast %201 : vector<16xf32> to vector<16x1xf32>
    %cst_61 = arith.constant 3.200000e+01 : f32
    %203 = vector.broadcast %cst_61 : f32 to vector<16x1xf32>
    %204 = arith.divf %202, %203 : vector<16x1xf32>
    %205 = vector.broadcast %204 : vector<16x1xf32> to vector<16x32xf32>
    %206 = arith.subf %198, %205 : vector<16x32xf32>
    %207 = arith.mulf %206, %206 : vector<16x32xf32>
    %cst_62 = arith.constant dense<0.000000e+00> : vector<16xf32>
    %208 = vector.multi_reduction <add>, %207, %cst_62 [1] : vector<16x32xf32> to vector<16xf32>
    %209 = vector.shape_cast %208 : vector<16xf32> to vector<16x1xf32>
    %cst_63 = arith.constant 3.200000e+01 : f32
    %210 = vector.broadcast %cst_63 : f32 to vector<16x1xf32>
    %211 = arith.divf %209, %210 : vector<16x1xf32>
    %cst_64 = arith.constant 9.99999974E-6 : f32
    %212 = vector.broadcast %cst_64 : f32 to vector<16x1xf32>
    %213 = arith.addf %211, %212 : vector<16x1xf32>
    %214 = math.rsqrt %213 : vector<16x1xf32>
    %215 = vector.broadcast %214 : vector<16x1xf32> to vector<16x32xf32>
    %216 = arith.mulf %206, %215 : vector<16x32xf32>
    %217 = vector.broadcast %199 : vector<1x32xf32> to vector<16x32xf32>
    %218 = arith.mulf %216, %217 : vector<16x32xf32>
    %219 = vector.broadcast %200 : vector<1x32xf32> to vector<16x32xf32>
    %220 = arith.addf %218, %219 : vector<16x32xf32>
    %221 = arith.truncf %220 : vector<16x32xf32> to vector<16x32xbf16>
    %cst_65 = arith.constant dense<0.000000e+00> : vector<16x64xf32>
    %222 = tpu.matmul %221, %2, %cst_65 {dimension_numbers = #tpu.dot_dimension_numbers<[1], [0], [0], [1], [0, 0, 1, 1], [], []>} : vector<16x32xbf16>, vector<32x64xbf16>, vector<16x64xf32> -> vector<16x64xf32>
    %223 = vector.broadcast %3 : vector<1x64xf32> to vector<16x64xf32>
    %224 = arith.addf %222, %223 : vector<16x64xf32>
    %cst_66 = arith.constant 5.000000e-01 : f32
    %225 = vector.broadcast %cst_66 : f32 to vector<16x64xf32>
    %226 = arith.mulf %225, %224 : vector<16x64xf32>
    %cst_67 = arith.constant 0.707106769 : f32
    %227 = vector.broadcast %cst_67 : f32 to vector<16x64xf32>
    %228 = arith.mulf %224, %227 : vector<16x64xf32>
    %229 = math.absf %228 : vector<16x64xf32>
    %cst_68 = arith.constant 0.327591091 : f32
    %230 = vector.broadcast %cst_68 : f32 to vector<16x64xf32>
    %231 = arith.mulf %230, %229 : vector<16x64xf32>
    %cst_69 = arith.constant 1.000000e+00 : f32
    %232 = vector.broadcast %cst_69 : f32 to vector<16x64xf32>
    %233 = arith.addf %232, %231 : vector<16x64xf32>
    %cst_70 = arith.constant 1.000000e+00 : f32
    %234 = vector.broadcast %cst_70 : f32 to vector<16x64xf32>
    %235 = arith.divf %234, %233 : vector<16x64xf32>
    %cst_71 = arith.constant 1.06140542 : f32
    %236 = vector.broadcast %cst_71 : f32 to vector<16x64xf32>
    %237 = arith.mulf %235, %236 : vector<16x64xf32>
    %cst_72 = arith.constant -1.45315206 : f32
    %238 = vector.broadcast %cst_72 : f32 to vector<16x64xf32>
    %239 = arith.addf %238, %237 : vector<16x64xf32>
    %240 = arith.mulf %235, %239 : vector<16x64xf32>
    %cst_73 = arith.constant 1.42141378 : f32
    %241 = vector.broadcast %cst_73 : f32 to vector<16x64xf32>
    %242 = arith.addf %241, %240 : vector<16x64xf32>
    %243 = arith.mulf %235, %242 : vector<16x64xf32>
    %cst_74 = arith.constant -0.284496725 : f32
    %244 = vector.broadcast %cst_74 : f32 to vector<16x64xf32>
    %245 = arith.addf %244, %243 : vector<16x64xf32>
    %246 = arith.mulf %235, %245 : vector<16x64xf32>
    %cst_75 = arith.constant 0.254829586 : f32
    %247 = vector.broadcast %cst_75 : f32 to vector<16x64xf32>
    %248 = arith.addf %247, %246 : vector<16x64xf32>
    %249 = arith.mulf %235, %248 : vector<16x64xf32>
    %cst_76 = arith.constant 0.000000e+00 : f32
    %250 = vector.broadcast %cst_76 : f32 to vector<16x64xf32>
    %251 = arith.subf %250, %228 : vector<16x64xf32>
    %252 = arith.mulf %251, %228 : vector<16x64xf32>
    %253 = math.exp %252 : vector<16x64xf32>
    %254 = arith.mulf %249, %253 : vector<16x64xf32>
    %cst_77 = arith.constant 1.000000e+00 : f32
    %255 = vector.broadcast %cst_77 : f32 to vector<16x64xf32>
    %256 = arith.subf %255, %254 : vector<16x64xf32>
    %cst_78 = arith.constant 0.000000e+00 : f32
    %257 = vector.broadcast %cst_78 : f32 to vector<16x64xf32>
    %258 = arith.cmpf oge, %228, %257 : vector<16x64xf32>
    %cst_79 = arith.constant 0.000000e+00 : f32
    %259 = vector.broadcast %cst_79 : f32 to vector<16x64xf32>
    %260 = arith.subf %259, %256 : vector<16x64xf32>
    %261 = arith.select %258, %256, %260 : vector<16x64xi1>, vector<16x64xf32>
    %cst_80 = arith.constant 1.000000e+00 : f32
    %262 = vector.broadcast %cst_80 : f32 to vector<16x64xf32>
    %263 = arith.addf %262, %261 : vector<16x64xf32>
    %264 = arith.mulf %226, %263 : vector<16x64xf32>
    %265 = arith.truncf %264 : vector<16x64xf32> to vector<16x64xbf16>
    %cst_81 = arith.constant dense<0.000000e+00> : vector<16x32xf32>
    %266 = tpu.matmul %265, %4, %cst_81 {dimension_numbers = #tpu.dot_dimension_numbers<[1], [0], [0], [1], [0, 0, 1, 1], [], []>} : vector<16x64xbf16>, vector<64x32xbf16>, vector<16x32xf32> -> vector<16x32xf32>
    %267 = vector.broadcast %9 : vector<1x32xf32> to vector<16x32xf32>
    %268 = arith.addf %266, %267 : vector<16x32xf32>
    %cst_82 = arith.constant 0.000000e+00 : f32
    %269 = vector.broadcast %cst_82 : f32 to vector<2x32xf32>
    %270 = arith.subf %269, %15 : vector<2x32xf32>
    %271 = math.exp %270 : vector<2x32xf32>
    %cst_83 = arith.constant 1.000000e+00 : f32
    %272 = vector.broadcast %cst_83 : f32 to vector<2x32xf32>
    %273 = arith.addf %272, %271 : vector<2x32xf32>
    %274 = arith.divf %15, %273 : vector<2x32xf32>
    %275 = arith.truncf %274 : vector<2x32xf32> to vector<2x32xbf16>
    %cst_84 = arith.constant dense<0.000000e+00> : vector<2x64xf32>
    %276 = tpu.matmul %275, %5, %cst_84 {dimension_numbers = #tpu.dot_dimension_numbers<[1], [0], [0], [1], [0, 0, 1, 1], [], []>} : vector<2x32xbf16>, vector<32x64xbf16>, vector<2x64xf32> -> vector<2x64xf32>
    %277 = vector.broadcast %6 : vector<1x64xf32> to vector<2x64xf32>
    %278 = arith.addf %276, %277 : vector<2x64xf32>
    %279 = vector.extract_strided_slice %278 {offsets = [0, 0], sizes = [2, 32], strides = [1, 1]} : vector<2x64xf32> to vector<2x32xf32>
    %280 = vector.shape_cast %279 : vector<2x32xf32> to vector<2x1x32xf32>
    %281 = vector.extract_strided_slice %278 {offsets = [0, 32], sizes = [2, 32], strides = [1, 1]} : vector<2x64xf32> to vector<2x32xf32>
    %282 = vector.shape_cast %281 : vector<2x32xf32> to vector<2x1x32xf32>
    %283 = vector.extract_strided_slice %0 {offsets = [10, 0], sizes = [1, 32], strides = [1, 1]} : vector<12x32xf32> to vector<1x32xf32>
    %284 = vector.extract_strided_slice %0 {offsets = [11, 0], sizes = [1, 32], strides = [1, 1]} : vector<12x32xf32> to vector<1x32xf32>
    %cst_85 = arith.constant dense<0.000000e+00> : vector<16xf32>
    %285 = vector.multi_reduction <add>, %268, %cst_85 [1] : vector<16x32xf32> to vector<16xf32>
    %286 = vector.shape_cast %285 : vector<16xf32> to vector<16x1xf32>
    %cst_86 = arith.constant 3.200000e+01 : f32
    %287 = vector.broadcast %cst_86 : f32 to vector<16x1xf32>
    %288 = arith.divf %286, %287 : vector<16x1xf32>
    %289 = vector.broadcast %288 : vector<16x1xf32> to vector<16x32xf32>
    %290 = arith.subf %268, %289 : vector<16x32xf32>
    %291 = arith.mulf %290, %290 : vector<16x32xf32>
    %cst_87 = arith.constant dense<0.000000e+00> : vector<16xf32>
    %292 = vector.multi_reduction <add>, %291, %cst_87 [1] : vector<16x32xf32> to vector<16xf32>
    %293 = vector.shape_cast %292 : vector<16xf32> to vector<16x1xf32>
    %cst_88 = arith.constant 3.200000e+01 : f32
    %294 = vector.broadcast %cst_88 : f32 to vector<16x1xf32>
    %295 = arith.divf %293, %294 : vector<16x1xf32>
    %cst_89 = arith.constant 9.99999974E-6 : f32
    %296 = vector.broadcast %cst_89 : f32 to vector<16x1xf32>
    %297 = arith.addf %295, %296 : vector<16x1xf32>
    %298 = math.rsqrt %297 : vector<16x1xf32>
    %299 = vector.broadcast %298 : vector<16x1xf32> to vector<16x32xf32>
    %300 = arith.mulf %290, %299 : vector<16x32xf32>
    %301 = vector.broadcast %283 : vector<1x32xf32> to vector<16x32xf32>
    %302 = arith.mulf %300, %301 : vector<16x32xf32>
    %303 = vector.broadcast %284 : vector<1x32xf32> to vector<16x32xf32>
    %304 = arith.addf %302, %303 : vector<16x32xf32>
    %305 = vector.shape_cast %304 : vector<16x32xf32> to vector<2x8x32xf32>
    %cst_90 = arith.constant 1.000000e+00 : f32
    %306 = vector.broadcast %cst_90 : f32 to vector<2x1x32xf32>
    %307 = arith.addf %306, %280 : vector<2x1x32xf32>
    %308 = vector.broadcast %307 : vector<2x1x32xf32> to vector<2x8x32xf32>
    %309 = arith.mulf %305, %308 : vector<2x8x32xf32>
    %310 = vector.broadcast %282 : vector<2x1x32xf32> to vector<2x8x32xf32>
    %311 = arith.addf %309, %310 : vector<2x8x32xf32>
    %312 = vector.shape_cast %311 : vector<2x8x32xf32> to vector<16x32xf32>
    %cst_91 = arith.constant 0.000000e+00 : f32
    %313 = vector.broadcast %cst_91 : f32 to vector<16x32xf32>
    %314 = arith.subf %313, %312 : vector<16x32xf32>
    %315 = math.exp %314 : vector<16x32xf32>
    %cst_92 = arith.constant 1.000000e+00 : f32
    %316 = vector.broadcast %cst_92 : f32 to vector<16x32xf32>
    %317 = arith.addf %316, %315 : vector<16x32xf32>
    %318 = arith.divf %312, %317 : vector<16x32xf32>
    %319 = arith.truncf %318 : vector<16x32xf32> to vector<16x32xbf16>
    %cst_93 = arith.constant dense<0.000000e+00> : vector<16x32xf32>
    %320 = tpu.matmul %319, %7, %cst_93 {dimension_numbers = #tpu.dot_dimension_numbers<[1], [0], [0], [1], [0, 0, 1, 1], [], []>} : vector<16x32xbf16>, vector<32x32xbf16>, vector<16x32xf32> -> vector<16x32xf32>
    %321 = vector.broadcast %10 : vector<1x32xf32> to vector<16x32xf32>
    %322 = arith.addf %320, %321 : vector<16x32xf32>
    %323 = arith.addf %220, %322 : vector<16x32xf32>
    %324 = arith.addf %220, %323 : vector<16x32xf32>
    %325 = vector.extract_strided_slice %0 {offsets = [8, 0], sizes = [1, 32], strides = [1, 1]} : vector<12x32xf32> to vector<1x32xf32>
    %326 = vector.extract_strided_slice %0 {offsets = [9, 0], sizes = [1, 32], strides = [1, 1]} : vector<12x32xf32> to vector<1x32xf32>
    %cst_94 = arith.constant dense<0.000000e+00> : vector<16xf32>
    %327 = vector.multi_reduction <add>, %324, %cst_94 [1] : vector<16x32xf32> to vector<16xf32>
    %328 = vector.shape_cast %327 : vector<16xf32> to vector<16x1xf32>
    %cst_95 = arith.constant 3.200000e+01 : f32
    %329 = vector.broadcast %cst_95 : f32 to vector<16x1xf32>
    %330 = arith.divf %328, %329 : vector<16x1xf32>
    %331 = vector.broadcast %330 : vector<16x1xf32> to vector<16x32xf32>
    %332 = arith.subf %324, %331 : vector<16x32xf32>
    %333 = arith.mulf %332, %332 : vector<16x32xf32>
    %cst_96 = arith.constant dense<0.000000e+00> : vector<16xf32>
    %334 = vector.multi_reduction <add>, %333, %cst_96 [1] : vector<16x32xf32> to vector<16xf32>
    %335 = vector.shape_cast %334 : vector<16xf32> to vector<16x1xf32>
    %cst_97 = arith.constant 3.200000e+01 : f32
    %336 = vector.broadcast %cst_97 : f32 to vector<16x1xf32>
    %337 = arith.divf %335, %336 : vector<16x1xf32>
    %cst_98 = arith.constant 9.99999974E-6 : f32
    %338 = vector.broadcast %cst_98 : f32 to vector<16x1xf32>
    %339 = arith.addf %337, %338 : vector<16x1xf32>
    %340 = math.rsqrt %339 : vector<16x1xf32>
    %341 = vector.broadcast %340 : vector<16x1xf32> to vector<16x32xf32>
    %342 = arith.mulf %332, %341 : vector<16x32xf32>
    %343 = vector.broadcast %325 : vector<1x32xf32> to vector<16x32xf32>
    %344 = arith.mulf %342, %343 : vector<16x32xf32>
    %345 = vector.broadcast %326 : vector<1x32xf32> to vector<16x32xf32>
    %346 = arith.addf %344, %345 : vector<16x32xf32>
    %347 = vector.shape_cast %346 : vector<16x32xf32> to vector<2x8x32xf32>
    %c0_99 = arith.constant 0 : index
    %c0_100 = arith.constant 0 : index
    %c0_101 = arith.constant 0 : index
    %348 = vector.load %arg13[%c0_99, %c0_100, %c0_101] : memref<2x8x32xf32, #tpu.memory_space<vmem>>, vector<2x8x32xf32>
    tpu.vector_store %arg13[%c0_99, %c0_100, %c0_101], %347 {strides = array<i32>} : memref<2x8x32xf32, #tpu.memory_space<vmem>>, vector<2x8x32xf32>,
    return
  }
  func.func @transform_0(%arg0: i32) -> (i32, i32, i32) {
    %c0_i32 = arith.constant 0 : i32
    %c0_i32_0 = arith.constant 0 : i32
    %c0_i32_1 = arith.constant 0 : i32
    return %arg0, %c0_i32, %c0_i32_0 : i32, i32, i32
  }
  func.func @transform_1(%arg0: i32) -> (i32, i32, i32) {
    %c0_i32 = arith.constant 0 : i32
    %c0_i32_0 = arith.constant 0 : i32
    %c0_i32_1 = arith.constant 0 : i32
    return %arg0, %c0_i32, %c0_i32_0 : i32, i32, i32
  }
  func.func @transform_2(%arg0: i32) -> (i32, i32) {
    %c0_i32 = arith.constant 0 : i32
    %c0_i32_0 = arith.constant 0 : i32
    return %arg0, %c0_i32 : i32, i32
  }
  func.func @transform_3(%arg0: i32) -> (i32, i32) {
    %c0_i32 = arith.constant 0 : i32
    %c0_i32_0 = arith.constant 0 : i32
    %c0_i32_1 = arith.constant 0 : i32
    return %c0_i32, %c0_i32_0 : i32, i32
  }
  func.func @transform_4(%arg0: i32) -> (i32, i32) {
    %c0_i32 = arith.constant 0 : i32
    %c0_i32_0 = arith.constant 0 : i32
    %c0_i32_1 = arith.constant 0 : i32
    return %c0_i32, %c0_i32_0 : i32, i32
  }
  func.func @transform_5(%arg0: i32) -> (i32, i32) {
    %c0_i32 = arith.constant 0 : i32
    %c0_i32_0 = arith.constant 0 : i32
    %c0_i32_1 = arith.constant 0 : i32
    return %c0_i32, %c0_i32_0 : i32, i32
  }
  func.func @transform_6(%arg0: i32) -> (i32, i32) {
    %c0_i32 = arith.constant 0 : i32
    %c0_i32_0 = arith.constant 0 : i32
    %c0_i32_1 = arith.constant 0 : i32
    return %c0_i32, %c0_i32_0 : i32, i32
  }
  func.func @transform_7(%arg0: i32) -> (i32, i32) {
    %c0_i32 = arith.constant 0 : i32
    %c0_i32_0 = arith.constant 0 : i32
    %c0_i32_1 = arith.constant 0 : i32
    return %c0_i32, %c0_i32_0 : i32, i32
  }
  func.func @transform_8(%arg0: i32) -> (i32, i32) {
    %c0_i32 = arith.constant 0 : i32
    %c0_i32_0 = arith.constant 0 : i32
    %c0_i32_1 = arith.constant 0 : i32
    return %c0_i32, %c0_i32_0 : i32, i32
  }
  func.func @transform_9(%arg0: i32) -> (i32, i32) {
    %c0_i32 = arith.constant 0 : i32
    %c0_i32_0 = arith.constant 0 : i32
    %c0_i32_1 = arith.constant 0 : i32
    return %c0_i32, %c0_i32_0 : i32, i32
  }
  func.func @transform_10(%arg0: i32) -> (i32, i32) {
    %c0_i32 = arith.constant 0 : i32
    %c0_i32_0 = arith.constant 0 : i32
    %c0_i32_1 = arith.constant 0 : i32
    return %c0_i32, %c0_i32_0 : i32, i32
  }
  func.func @transform_11(%arg0: i32) -> (i32, i32) {
    %c0_i32 = arith.constant 0 : i32
    %c0_i32_0 = arith.constant 0 : i32
    %c0_i32_1 = arith.constant 0 : i32
    return %c0_i32, %c0_i32_0 : i32, i32
  }
  func.func @transform_12(%arg0: i32) -> (i32, i32, i32) {
    %c0_i32 = arith.constant 0 : i32
    %c0_i32_0 = arith.constant 0 : i32
    %c0_i32_1 = arith.constant 0 : i32
    return %arg0, %c0_i32, %c0_i32_0 : i32, i32, i32
  }
}

</mosaic_0001>

<llo_original>
// kernel: tpu_custom_call.1
$region0: #{tpu_custom_call.1}
  #allocation0 [shape = 'u32[]', space=smem, size = 0x4, offset = 0x4, fixed_abs, tag = 'smem constant byte address 0x4 - core index']
  #allocation1 [shape = 'u32[144,128]{1,0:T(1,128)}', space=vmem, size = 0x12000, scoped, tag = 'internal scratch']
  %s0 = inlined_call_operand.vmem [shape: f32[2,8,32], index: 0, kind: input, shape index: {}]
  %s1 = inlined_call_operand.hbm [shape: f32[2,8,32], index: 1, kind: input, shape index: {}]
  %s2 = inlined_call_operand.vmem [shape: f32[2,32], index: 2, kind: input, shape index: {}]
  %s3 = inlined_call_operand.hbm [shape: f32[12,32], index: 3, kind: input, shape index: {}]
  %s4 = inlined_call_operand.vmem [shape: bf16[32,192], index: 4, kind: input, shape index: {}]
  %s5 = inlined_call_operand.hbm [shape: bf16[32,64], index: 5, kind: input, shape index: {}]
  %s6 = inlined_call_operand.hbm [shape: f32[1,64], index: 6, kind: input, shape index: {}]
  %s7 = inlined_call_operand.vmem [shape: bf16[64,32], index: 7, kind: input, shape index: {}]
  %s8 = inlined_call_operand.hbm [shape: bf16[32,64], index: 8, kind: input, shape index: {}]
  %s9 = inlined_call_operand.hbm [shape: f32[1,64], index: 9, kind: input, shape index: {}]
  %s10 = inlined_call_operand.vmem [shape: bf16[32,32], index: 10, kind: input, shape index: {}]
  %s11 = inlined_call_operand.vmem [shape: f32[2,32], index: 11, kind: input, shape index: {}]
  %s12 = inlined_call_operand.hbm [shape: f32[2,8,32], index: 12, kind: output, shape index: {}]
  %s13 = sld [smem:[#allocation0]]
  $region82: #{tpu_custom_call.1} parent=0
    _
  %s15 = ssub.s32 1, %s13
  %s16 = scalar_select 0, %s15, %s13
  $region1: #{tpu_custom_call.1} parent=0
    #allocation2 [shape = 'u8[8192]{0}', space=vmem, size = 0x2000, scoped, tag = 'input window, operand 1, single buffered']
    #allocation3 [shape = 's32[1]{0}', space=sflag, size = 0x4, scoped, tag = 'scoped memory for tpu_custom_call.1']
    #allocation4 [shape = 's32[1]{0}', space=sflag, size = 0x4, scoped, tag = 'scoped memory for tpu_custom_call.1']
    #allocation5 [shape = 'u8[8192]{0}', space=vmem, size = 0x2000, scoped, tag = 'input window, operand 3, single buffered']
    #allocation6 [shape = 's32[1]{0}', space=sflag, size = 0x4, scoped, tag = 'scoped memory for tpu_custom_call.1']
    #allocation7 [shape = 'u8[8192]{0}', space=vmem, size = 0x2000, scoped, tag = 'input window, operand 5, single buffered']
    #allocation8 [shape = 'u8[512]{0}', space=vmem, size = 0x400, scoped, tag = 'input window, operand 6, single buffered']
    #allocation9 [shape = 's32[1]{0}', space=sflag, size = 0x4, scoped, tag = 'scoped memory for tpu_custom_call.1']
    #allocation10 [shape = 'u8[8192]{0}', space=vmem, size = 0x2000, scoped, tag = 'input window, operand 8, single buffered']
    #allocation11 [shape = 'u8[512]{0}', space=vmem, size = 0x400, scoped, tag = 'input window, operand 9, single buffered']
    #allocation12 [shape = 's32[1]{0}', space=sflag, size = 0x4, scoped, tag = 'scoped memory for tpu_custom_call.1']
    #allocation13 [shape = 'u8[8192]{0}', space=vmem, size = 0x2000, scoped, tag = 'output window, operand 0, single buffered']
    %17 = vsyncpa [#allocation3], 0
    %18 = vsyncpa [#allocation6], 0
    %19 = vsyncpa [#allocation9], 0
    %20 = vsyncpa [#allocation12], 0
    %21 = vsyncpa [#allocation4], 0
    // Predicated region
    $region2: #{tpu_custom_call.1} parent=1 // pred_check
      _
    $region3: #{tpu_custom_call.1} parent=1 // pred_check_branch
      %23 = sbr.rel (0) target = $region5
    $region4: #{tpu_custom_call.1} parent=1 // pred_region
      _
    $region5: #{tpu_custom_call.1} parent=1 // pred_fallthru
      _
    // Predicated region
    $region6: #{tpu_custom_call.1} parent=1 // pred_check
      _
    $region7: #{tpu_custom_call.1} parent=1 // pred_check_branch
      %25 = sbr.rel (0) target = $region9
    $region8: #{tpu_custom_call.1} parent=1 // pred_region
      %s27 = ssub.s32 256, 256
      %28 = vsyncadd [#allocation3], %s27
      %s29 = sshll.u32 [#allocation2], 4
      %s30 = int_to_ptr.vmem [resolvable:$true] %s29
      %35 = dma.hbm_to_vmem [thread:$0]  %s1, 256, %s30, [#allocation3], 128, 128, 8
    $region9: #{tpu_custom_call.1} parent=1 // pred_fallthru
      _
    // Predicated region
    $region10: #{tpu_custom_call.1} parent=1 // pred_check
      _
    $region11: #{tpu_custom_call.1} parent=1 // pred_check_branch
      %37 = sbr.rel (0) target = $region13
    $region12: #{tpu_custom_call.1} parent=1 // pred_region
      _
    $region13: #{tpu_custom_call.1} parent=1 // pred_fallthru
      _
    // Predicated region
    $region14: #{tpu_custom_call.1} parent=1 // pred_check
      _
    $region15: #{tpu_custom_call.1} parent=1 // pred_check_branch
      %39 = sbr.rel (0) target = $region17
    $region16: #{tpu_custom_call.1} parent=1 // pred_region
      %s41 = ssub.s32 256, 256
      %42 = vsyncadd [#allocation6], %s41
      %s43 = sshll.u32 [#allocation5], 4
      %s44 = int_to_ptr.vmem [resolvable:$true] %s43
      %49 = dma.hbm_to_vmem [thread:$0]  %s3, 256, %s44, [#allocation6], 128, 128, 8
    $region17: #{tpu_custom_call.1} parent=1 // pred_fallthru
      _
    // Predicated region
    $region18: #{tpu_custom_call.1} parent=1 // pred_check
      _
    $region19: #{tpu_custom_call.1} parent=1 // pred_check_branch
      %51 = sbr.rel (0) target = $region21
    $region20: #{tpu_custom_call.1} parent=1 // pred_region
      _
    $region21: #{tpu_custom_call.1} parent=1 // pred_fallthru
      _
    // Predicated region
    $region22: #{tpu_custom_call.1} parent=1 // pred_check
      _
    $region23: #{tpu_custom_call.1} parent=1 // pred_check_branch
      %53 = sbr.rel (0) target = $region25
    $region24: #{tpu_custom_call.1} parent=1 // pred_region
      %s55 = ssub.s32 256, 256
      %56 = vsyncadd [#allocation6], %s55
      %s57 = sshll.u32 [#allocation7], 4
      %s58 = int_to_ptr.vmem [resolvable:$true] %s57
      %63 = dma.hbm_to_vmem [thread:$0]  %s5, 256, %s58, [#allocation6], 64, 64, 4
    $region25: #{tpu_custom_call.1} parent=1 // pred_fallthru
      _
    // Predicated region
    $region26: #{tpu_custom_call.1} parent=1 // pred_check
      _
    $region27: #{tpu_custom_call.1} parent=1 // pred_check_branch
      %65 = sbr.rel (0) target = $region29
    $region28: #{tpu_custom_call.1} parent=1 // pred_region
      %s67 = ssub.s32 16, 16
      %68 = vsyncadd [#allocation9], %s67
      %s70 = sshll.u32 [#allocation8], 4
      %s71 = int_to_ptr.vmem [resolvable:$true] %s70
      %73 = dma.hbm_to_vmem [thread:$0]  %s6, 16, %s71, [#allocation9]
    $region29: #{tpu_custom_call.1} parent=1 // pred_fallthru
      _
    // Predicated region
    $region30: #{tpu_custom_call.1} parent=1 // pred_check
      _
    $region31: #{tpu_custom_call.1} parent=1 // pred_check_branch
      %75 = sbr.rel (0) target = $region33
    $region32: #{tpu_custom_call.1} parent=1 // pred_region
      _
    $region33: #{tpu_custom_call.1} parent=1 // pred_fallthru
      _
    // Predicated region
    $region34: #{tpu_custom_call.1} parent=1 // pred_check
      _
    $region35: #{tpu_custom_call.1} parent=1 // pred_check_branch
      %77 = sbr.rel (0) target = $region37
    $region36: #{tpu_custom_call.1} parent=1 // pred_region
      %s79 = ssub.s32 256, 256
      %80 = vsyncadd [#allocation9], %s79
      %s81 = sshll.u32 [#allocation10], 4
      %s82 = int_to_ptr.vmem [resolvable:$true] %s81
      %87 = dma.hbm_to_vmem [thread:$0]  %s8, 256, %s82, [#allocation9], 64, 64, 4
    $region37: #{tpu_custom_call.1} parent=1 // pred_fallthru
      _
    // Predicated region
    $region38: #{tpu_custom_call.1} parent=1 // pred_check
      _
    $region39: #{tpu_custom_call.1} parent=1 // pred_check_branch
      %89 = sbr.rel (0) target = $region41
    $region40: #{tpu_custom_call.1} parent=1 // pred_region
      %s91 = ssub.s32 16, 16
      %92 = vsyncadd [#allocation12], %s91
      %s94 = sshll.u32 [#allocation11], 4
      %s95 = int_to_ptr.vmem [resolvable:$true] %s94
      %97 = dma.hbm_to_vmem [thread:$0]  %s9, 16, %s95, [#allocation12]
    $region41: #{tpu_custom_call.1} parent=1 // pred_fallthru
      _
    // Predicated region
    $region42: #{tpu_custom_call.1} parent=1 // pred_check
      _
    $region43: #{tpu_custom_call.1} parent=1 // pred_check_branch
      %99 = sbr.rel (0) target = $region45
    $region44: #{tpu_custom_call.1} parent=1 // pred_region
      _
    $region45: #{tpu_custom_call.1} parent=1 // pred_fallthru
      _
    // Predicated region
    $region46: #{tpu_custom_call.1} parent=1 // pred_check
      _
    $region47: #{tpu_custom_call.1} parent=1 // pred_check_branch
      %101 = sbr.rel (0) target = $region49
    $region48: #{tpu_custom_call.1} parent=1 // pred_region
      _
    $region49: #{tpu_custom_call.1} parent=1 // pred_fallthru
      _
    // Predicated region
    $region50: #{tpu_custom_call.1} parent=1 // pred_check
      _
    $region51: #{tpu_custom_call.1} parent=1 // pred_check_branch
      %103 = sbr.rel (0) target = $region53
    $region52: #{tpu_custom_call.1} parent=1 // pred_region
      %104 = dma.done [#allocation3], 256
    $region53: #{tpu_custom_call.1} parent=1 // pred_fallthru
      _
    // Predicated region
    $region54: #{tpu_custom_call.1} parent=1 // pred_check
      _
    $region55: #{tpu_custom_call.1} parent=1 // pred_check_branch
      %106 = sbr.rel (0) target = $region57
    $region56: #{tpu_custom_call.1} parent=1 // pred_region
      %107 = dma.done [#allocation6], 256
    $region57: #{tpu_custom_call.1} parent=1 // pred_fallthru
      _
    // Predicated region
    $region58: #{tpu_custom_call.1} parent=1 // pred_check
      _
    $region59: #{tpu_custom_call.1} parent=1 // pred_check_branch
      %109 = sbr.rel (0) target = $region61
    $region60: #{tpu_custom_call.1} parent=1 // pred_region
      %110 = dma.done [#allocation6], 256
    $region61: #{tpu_custom_call.1} parent=1 // pred_fallthru
      _
    // Predicated region
    $region62: #{tpu_custom_call.1} parent=1 // pred_check
      _
    $region63: #{tpu_custom_call.1} parent=1 // pred_check_branch
      %112 = sbr.rel (0) target = $region65
    $region64: #{tpu_custom_call.1} parent=1 // pred_region
      %113 = dma.done [#allocation9], 16
    $region65: #{tpu_custom_call.1} parent=1 // pred_fallthru
      _
    // Predicated region
    $region66: #{tpu_custom_call.1} parent=1 // pred_check
      _
    $region67: #{tpu_custom_call.1} parent=1 // pred_check_branch
      %115 = sbr.rel (0) target = $region69
    $region68: #{tpu_custom_call.1} parent=1 // pred_region
      %116 = dma.done [#allocation9], 256
    $region69: #{tpu_custom_call.1} parent=1 // pred_fallthru
      _
    // Predicated region
    $region70: #{tpu_custom_call.1} parent=1 // pred_check
      _
    $region71: #{tpu_custom_call.1} parent=1 // pred_check_branch
      %118 = sbr.rel (0) target = $region73
    $region72: #{tpu_custom_call.1} parent=1 // pred_region
      %119 = dma.done [#allocation12], 16
    $region73: #{tpu_custom_call.1} parent=1 // pred_fallthru
      _
    %v121 = vld [vmem:[#allocation5] sm:$0xff]
    %v122 = vld [vmem:[#allocation5 + $0x8] sm:$0xf]
    %v123 = vld [vmem:[%s4] sm:$0xff]
    %v124 = vld [vmem:[%s4 + $0x8] sm:$0xff]
    %v125 = vld [vmem:[%s4 + $0x10] sm:$0xff]
    %v126 = vld [vmem:[%s4 + $0x18] sm:$0xff]
    %v127 = vld [vmem:[#allocation7] sm:$0xf]
    %v128 = vld [vmem:[#allocation7 + $0x4] sm:$0xf]
    %v129 = vld [vmem:[#allocation7 + $0x8] sm:$0xf]
    %v130 = vld [vmem:[#allocation7 + $0xc] sm:$0xf]
    %v131 = vld [vmem:[#allocation8] sm:$0x1]
    %v132 = vld [vmem:[%s7] sm:$0xf]
    %v133 = vld [vmem:[%s7 + $0x4] sm:$0xf]
    %v134 = vld [vmem:[%s7 + $0x8] sm:$0xf]
    %v135 = vld [vmem:[%s7 + $0xc] sm:$0xf]
    %v136 = vld [vmem:[%s7 + $0x10] sm:$0xf]
    %v137 = vld [vmem:[%s7 + $0x14] sm:$0xf]
    %v138 = vld [vmem:[%s7 + $0x18] sm:$0xf]
    %v139 = vld [vmem:[%s7 + $0x1c] sm:$0xf]
    %v140 = vld [vmem:[#allocation10] sm:$0xf]
    %v141 = vld [vmem:[#allocation10 + $0x4] sm:$0xf]
    %v142 = vld [vmem:[#allocation10 + $0x8] sm:$0xf]
    %v143 = vld [vmem:[#allocation10 + $0xc] sm:$0xf]
    %v144 = vld [vmem:[#allocation11] sm:$0x1]
    %v145 = vld [vmem:[%s10] sm:$0xf]
    %v146 = vld [vmem:[%s10 + $0x4] sm:$0xf]
    %v147 = vld [vmem:[%s10 + $0x8] sm:$0xf]
    %v148 = vld [vmem:[%s10 + $0xc] sm:$0xf]
    %v149 = vld [vmem:[%s11] sm:$0x3]
    %v150 = vld [vmem:[%s0] sm:$0xff]
    %v151 = vld [vmem:[%s0 + $0x8] sm:$0xff]
    %v152 = vld [vmem:[#allocation2] sm:$0xff]
    %v153 = vld [vmem:[#allocation2 + $0x8] sm:$0xff]
    %v154 = vld [vmem:[%s2] sm:$0x3]
    %v155 = vlaneseq
    %v156 = vand.u32 %v155, 127
    %v157 = vlaneseq
    %v158 = vshrl.u32 %v157, 7
    %v159 = vmul.u32 %v158, 8
    %vm160 = vcmp.ge.s32.totalorder %v156, %v159
    %v161 = vadd.s32 %v158, 1
    %v162 = vmul.u32 %v161, 8
    %vm163 = vcmp.lt.s32.totalorder %v156, %v162
    %vm164 = vmand %vm160, %vm163
    %v165 = vsel %vm164, 1, 0
    %v166 = vcvt.s32.f32 %v165
    %vm167 = vcmask 261120
    %v168 = vsel %vm167, %v150, 0.0
    %169 = vadd.xlane.f32.xlu0 %v168
    %v170 = vpop.xlane.xlu0 %169
    %v171 = vsel %vm167, %v151, 0.0
    %172 = vadd.xlane.f32.xlu0 %v171
    %v173 = vpop.xlane.xlu0 %172
    %v174 = vrcp.pop 32.0
    %v175 = vmul.f32 %v170, %v174
    %v176 = vmul.f32 %v173, %v174
    %v177 = vsub.f32 %v150, %v175
    %v178 = vsub.f32 %v151, %v176
    %v179 = vmul.f32 %v177, %v177
    %v180 = vmul.f32 %v178, %v178
    %v181 = vsel %vm167, %v179, 0.0
    %182 = vadd.xlane.f32.xlu0 %v181
    %v183 = vpop.xlane.xlu0 %182
    %v184 = vsel %vm167, %v180, 0.0
    %185 = vadd.xlane.f32.xlu0 %v184
    %v186 = vpop.xlane.xlu0 %185
    %v187 = vmul.f32 %v183, %v174
    %v188 = vmul.f32 %v186, %v174
    %v189 = vadd.f32 %v187, 1e-05
    %v190 = vadd.f32 %v188, 1e-05
    %v191 = vrsqrt.pop %v189
    %v192 = vrsqrt.pop %v190
    %v193 = vmul.f32 %v177, %v191
    %v194 = vmul.f32 %v178, %v192
    %v195 = vlaneseq
    %v196 = vshrl.u32 %v195, 7
    %v197 = vsub.s32 0, %v196
    %v198 = vrot.slane %v121, %v197
    %v199 = vmul.f32 %v193, %v198
    %v200 = vmul.f32 %v194, %v198
    %v201 = vlaneseq
    %v202 = vshrl.u32 %v201, 7
    %v203 = vsub.s32 1, %v202
    %v204 = vrot.slane %v121, %v203
    %v205 = vadd.f32 %v199, %v204
    %v206 = vadd.f32 %v200, %v204
    %v207 = vpack.c.bf16 %v206, %v205
    %v212 = vunpack.c.l.b16 %v123
    %v213 = vunpack.c.l.b16 %v124
    %v214 = vunpack.c.l.b16 %v125
    %v215 = vunpack.c.l.b16 %v126
    %v216 = vpack.c.b16 %v213, %v212
    %v217 = vpack.c.b16 %v215, %v214
    %v221 = vsel %vm167, %v207, 0
    %223 = vmatprep.subr.bf16.mxu0 0
    %224 = vmatpush1.bf16.msra.mxu0 %v216
    %225 = vmatprep.subr.bf16.mxu0 0
    %226 = vmatpush1.bf16.msra.mxu0 %v217
    %227 = vmatprep.subr.bf16.mxu0 0
    %228 = vmatpush1.bf16.msra.mxu0 0
    %229 = vmatprep.subr.bf16.mxu0 0
    %230 = vmatpush1.bf16.msra.mxu0 0
    %231 = vmatprep.subr.bf16.mxu0 0
    %232 = vmatpush1.bf16.msra.mxu0 0
    %233 = vmatprep.subr.bf16.mxu0 0
    %234 = vmatpush1.bf16.msra.mxu0 0
    %235 = vmatprep.subr.bf16.mxu0 0
    %236 = vmatpush1.bf16.msra.mxu0 0
    %237 = vmatprep.subr.bf16.mxu0 0
    %238 = vmatpush1.bf16.msra.mxu0 0
    %239 = vmatprep.subr.bf16.mxu0 0
    %240 = vmatpush1.bf16.msra.mxu0 0
    %241 = vmatprep.subr.bf16.mxu0 0
    %242 = vmatpush1.bf16.msra.mxu0 0
    %243 = vmatprep.subr.bf16.mxu0 0
    %244 = vmatpush1.bf16.msra.mxu0 0
    %245 = vmatprep.subr.bf16.mxu0 0
    %246 = vmatpush1.bf16.msra.mxu0 0
    %247 = vmatprep.subr.bf16.mxu0 0
    %248 = vmatpush1.bf16.msra.mxu0 0
    %249 = vmatprep.subr.bf16.mxu0 0
    %250 = vmatpush1.bf16.msra.mxu0 0
    %251 = vmatprep.subr.bf16.mxu0 0
    %252 = vmatpush1.bf16.msra.mxu0 0
    %253 = vmatprep.subr.bf16.mxu0 0
    %254 = vmatpush1.bf16.msra.mxu0 0
    %255 = vmatprep.mubr.bf16.mxu0 0
    %256 = vmatmul.mubr.bf16.gmra.mrb[0].mxu0 %v221
    %v257 = vpop.f32.mrb[0].mxu0
    %v258 = vadd.f32 0.0, %v257
    %v259 = vpop.f32.mrb[0].mxu0
    %v260 = vpop.f32.mrb[0].mxu0
    %v261 = vadd.f32 0.0, %v260
    %v262 = vpop.f32.mrb[0].mxu0
    %263 = vdwg.mxu0
    %v264 = vmul.f32 %v258, 0.35355338
    %v265 = vmul.f32 %v261, 0.35355338
    %v268 = vunpack.c.l.s4 1966171168
    %v269 = vunpack.c.0.s8 %v268
    %v270 = vlaneseq
    %v271 = vshrl.u32 %v270, 7
    %v272 = vsub.s32 %v269, %v271
    %v273 = vrot.slane %v166, %v272
    %v274 = vcombine.high %v273, %v273
    %v276 = vunpack.c.l.s4 1966171168
    %v277 = vunpack.c.0.s8 %v276
    %v278 = vlaneseq
    %v279 = vshrl.u32 %v278, 7
    %v280 = vsub.s32 %v277, %v279
    %v281 = vrot.slane %v273, %v280
    %v283 = vunpack.c.l.s4 1966171168
    %v284 = vunpack.c.0.s8 %v283
    %v285 = vlaneseq
    %v286 = vshrl.u32 %v285, 7
    %v287 = vsub.s32 %v284, %v286
    %v288 = vrot.slane %v274, %v287
    %v289 = vcombine.high %v281, %v281
    %v290 = vcombine.high %v288, %v288
    %v291 = vlaneseq
    %v292 = vshrl.u32 %v291, 7
    %v293 = vsub.s32 0, %v292
    %v294 = vrot.slane %v281, %v293
    %v295 = vlaneseq
    %v296 = vshrl.u32 %v295, 7
    %v297 = vsub.s32 0, %v296
    %v298 = vrot.slane %v288, %v297
    %v299 = vlaneseq
    %v300 = vshrl.u32 %v299, 7
    %v301 = vsub.s32 0, %v300
    %v302 = vrot.slane %v289, %v301
    %v303 = vlaneseq
    %v304 = vshrl.u32 %v303, 7
    %v305 = vsub.s32 0, %v304
    %v306 = vrot.slane %v290, %v305
    %v311 = vmul.f32 %v264, %v294
    %v312 = vmul.f32 %v264, %v298
    %v313 = vmul.f32 %v264, %v302
    %v314 = vmul.f32 %v264, %v306
    %v315 = vmul.f32 %v265, %v294
    %v316 = vmul.f32 %v265, %v298
    %v317 = vmul.f32 %v265, %v302
    %v318 = vmul.f32 %v265, %v306
    %v319 = vpack.c.bf16 %v312, %v311
    %v320 = vpack.c.bf16 %v314, %v313
    %v321 = vpack.c.bf16 %v316, %v315
    %v322 = vpack.c.bf16 %v318, %v317
    %v323 = vpack.c.bf16 %v258, %v258
    %v324 = vpack.c.bf16 %v261, %v261
    %326 = vrot.lane.b32.xlu0 %v323, 96
    %v327 = vpop.permute.xlu0 %326
    %v329 = vsel %vm167, %v319, 0
    %v332 = vsel %vm167, %v320, 0
    %v335 = vsel %vm167, %v327, 0
    %337 = vmatprep.subr.bf16.mxu0 0
    %338 = vmatpush1.bf16.xpose.msra.mxu0 %v335
    %339 = vmatprep.subr.bf16.mxu0 0
    %340 = vmatpush1.bf16.xpose.msra.mxu0 0
    %341 = vmatprep.subr.bf16.mxu0 0
    %342 = vmatpush1.bf16.xpose.msra.mxu0 0
    %343 = vmatprep.subr.bf16.mxu0 0
    %344 = vmatpush1.bf16.xpose.msra.mxu0 0
    %345 = vmatprep.subr.bf16.mxu0 0
    %346 = vmatpush1.bf16.xpose.msra.mxu0 0
    %347 = vmatprep.subr.bf16.mxu0 0
    %348 = vmatpush1.bf16.xpose.msra.mxu0 0
    %349 = vmatprep.subr.bf16.mxu0 0
    %350 = vmatpush1.bf16.xpose.msra.mxu0 0
    %351 = vmatprep.subr.bf16.mxu0 0
    %352 = vmatpush1.bf16.xpose.msra.mxu0 0
    %353 = vmatprep.subr.bf16.mxu0 0
    %354 = vmatpush1.bf16.xpose.msra.mxu0 0
    %355 = vmatprep.subr.bf16.mxu0 0
    %356 = vmatpush1.bf16.xpose.msra.mxu0 0
    %357 = vmatprep.subr.bf16.mxu0 0
    %358 = vmatpush1.bf16.xpose.msra.mxu0 0
    %359 = vmatprep.subr.bf16.mxu0 0
    %360 = vmatpush1.bf16.xpose.msra.mxu0 0
    %361 = vmatprep.subr.bf16.mxu0 0
    %362 = vmatpush1.bf16.xpose.msra.mxu0 0
    %363 = vmatprep.subr.bf16.mxu0 0
    %364 = vmatpush1.bf16.xpose.msra.mxu0 0
    %365 = vmatprep.subr.bf16.mxu0 0
    %366 = vmatpush1.bf16.xpose.msra.mxu0 0
    %367 = vmatprep.subr.bf16.mxu0 0
    %368 = vmatpush1.bf16.xpose.msra.mxu0 0
    %369 = vmatprep.mubr.bf16.mxu0 0
    %370 = vmatmul.mubr.bf16.gmra.mrb[0].mxu0 %v329
    %v371 = vpop.f32.mrb[0].mxu0
    %v372 = vadd.f32 0.0, %v371
    %v373 = vpop.f32.mrb[0].mxu0
    %v374 = vpop.f32.mrb[0].mxu0
    %v375 = vadd.f32 0.0, %v374
    %v376 = vpop.f32.mrb[0].mxu0
    %377 = vmatprep.mubr.bf16.mxu0 0
    %378 = vmatmul.mubr.bf16.gmra.mrb[0].mxu0 %v332
    %v379 = vpop.f32.mrb[0].mxu0
    %v380 = vadd.f32 0.0, %v379
    %v381 = vpop.f32.mrb[0].mxu0
    %v382 = vpop.f32.mrb[0].mxu0
    %v383 = vadd.f32 0.0, %v382
    %v384 = vpop.f32.mrb[0].mxu0
    %385 = vdwg.mxu0
    %387 = vrot.lane.b32.xlu0 %v324, 96
    %v388 = vpop.permute.xlu0 %387
    %v390 = vsel %vm167, %v321, 0
    %v393 = vsel %vm167, %v322, 0
    %v396 = vsel %vm167, %v388, 0
    %398 = vmatprep.subr.bf16.mxu0 0
    %399 = vmatpush1.bf16.xpose.msra.mxu0 %v396
    %400 = vmatprep.subr.bf16.mxu0 0
    %401 = vmatpush1.bf16.xpose.msra.mxu0 0
    %402 = vmatprep.subr.bf16.mxu0 0
    %403 = vmatpush1.bf16.xpose.msra.mxu0 0
    %404 = vmatprep.subr.bf16.mxu0 0
    %405 = vmatpush1.bf16.xpose.msra.mxu0 0
    %406 = vmatprep.subr.bf16.mxu0 0
    %407 = vmatpush1.bf16.xpose.msra.mxu0 0
    %408 = vmatprep.subr.bf16.mxu0 0
    %409 = vmatpush1.bf16.xpose.msra.mxu0 0
    %410 = vmatprep.subr.bf16.mxu0 0
    %411 = vmatpush1.bf16.xpose.msra.mxu0 0
    %412 = vmatprep.subr.bf16.mxu0 0
    %413 = vmatpush1.bf16.xpose.msra.mxu0 0
    %414 = vmatprep.subr.bf16.mxu0 0
    %415 = vmatpush1.bf16.xpose.msra.mxu0 0
    %416 = vmatprep.subr.bf16.mxu0 0
    %417 = vmatpush1.bf16.xpose.msra.mxu0 0
    %418 = vmatprep.subr.bf16.mxu0 0
    %419 = vmatpush1.bf16.xpose.msra.mxu0 0
    %420 = vmatprep.subr.bf16.mxu0 0
    %421 = vmatpush1.bf16.xpose.msra.mxu0 0
    %422 = vmatprep.subr.bf16.mxu0 0
    %423 = vmatpush1.bf16.xpose.msra.mxu0 0
    %424 = vmatprep.subr.bf16.mxu0 0
    %425 = vmatpush1.bf16.xpose.msra.mxu0 0
    %426 = vmatprep.subr.bf16.mxu0 0
    %427 = vmatpush1.bf16.xpose.msra.mxu0 0
    %428 = vmatprep.subr.bf16.mxu0 0
    %429 = vmatpush1.bf16.xpose.msra.mxu0 0
    %430 = vmatprep.mubr.bf16.mxu0 0
    %431 = vmatmul.mubr.bf16.gmra.mrb[0].mxu0 %v390
    %v432 = vpop.f32.mrb[0].mxu0
    %v433 = vadd.f32 0.0, %v432
    %v434 = vpop.f32.mrb[0].mxu0
    %v435 = vpop.f32.mrb[0].mxu0
    %v436 = vadd.f32 0.0, %v435
    %v437 = vpop.f32.mrb[0].mxu0
    %438 = vmatprep.mubr.bf16.mxu0 0
    %439 = vmatmul.mubr.bf16.gmra.mrb[0].mxu0 %v393
    %v440 = vpop.f32.mrb[0].mxu0
    %v441 = vadd.f32 0.0, %v440
    %v442 = vpop.f32.mrb[0].mxu0
    %v443 = vpop.f32.mrb[0].mxu0
    %v444 = vadd.f32 0.0, %v443
    %v445 = vpop.f32.mrb[0].mxu0
    %446 = vdwg.mxu0
    %vm447 = vcmask 64512
    %v448 = vsel %vm447, %v372, -inf
    %449 = vmax.xlane.f32.xlu0 %v448
    %v450 = vpop.xlane.xlu0 %449
    %v451 = vsel %vm447, %v375, -inf
    %452 = vmax.xlane.f32.xlu0 %v451
    %v453 = vpop.xlane.xlu0 %452
    %v454 = vsel %vm447, %v380, -inf
    %455 = vmax.xlane.f32.xlu0 %v454
    %v456 = vpop.xlane.xlu0 %455
    %v457 = vsel %vm447, %v383, -inf
    %458 = vmax.xlane.f32.xlu0 %v457
    %v459 = vpop.xlane.xlu0 %458
    %v460 = vsel %vm447, %v433, -inf
    %461 = vmax.xlane.f32.xlu0 %v460
    %v462 = vpop.xlane.xlu0 %461
    %v463 = vsel %vm447, %v436, -inf
    %464 = vmax.xlane.f32.xlu0 %v463
    %v465 = vpop.xlane.xlu0 %464
    %v466 = vsel %vm447, %v441, -inf
    %467 = vmax.xlane.f32.xlu0 %v466
    %v468 = vpop.xlane.xlu0 %467
    %v469 = vsel %vm447, %v444, -inf
    %470 = vmax.xlane.f32.xlu0 %v469
    %v471 = vpop.xlane.xlu0 %470
    %v472 = vsub.f32 %v372, %v450
    %v473 = vsub.f32 %v375, %v453
    %v474 = vsub.f32 %v380, %v456
    %v475 = vsub.f32 %v383, %v459
    %v476 = vsub.f32 %v433, %v462
    %v477 = vsub.f32 %v436, %v465
    %v478 = vsub.f32 %v441, %v468
    %v479 = vsub.f32 %v444, %v471
    %v480 = vmul.f32 %v472, 1.442695
    %v481 = vpow.pop %v480
    %v482 = vmul.f32 %v473, 1.442695
    %v483 = vpow.pop %v482
    %v484 = vmul.f32 %v474, 1.442695
    %v485 = vpow.pop %v484
    %v486 = vmul.f32 %v475, 1.442695
    %v487 = vpow.pop %v486
    %v488 = vmul.f32 %v476, 1.442695
    %v489 = vpow.pop %v488
    %v490 = vmul.f32 %v477, 1.442695
    %v491 = vpow.pop %v490
    %v492 = vmul.f32 %v478, 1.442695
    %v493 = vpow.pop %v492
    %v494 = vmul.f32 %v479, 1.442695
    %v495 = vpow.pop %v494
    %v496 = vsel %vm447, %v481, 0.0
    %497 = vadd.xlane.f32.xlu0 %v496
    %v498 = vpop.xlane.xlu0 %497
    %v499 = vsel %vm447, %v483, 0.0
    %500 = vadd.xlane.f32.xlu0 %v499
    %v501 = vpop.xlane.xlu0 %500
    %v502 = vsel %vm447, %v485, 0.0
    %503 = vadd.xlane.f32.xlu0 %v502
    %v504 = vpop.xlane.xlu0 %503
    %v505 = vsel %vm447, %v487, 0.0
    %506 = vadd.xlane.f32.xlu0 %v505
    %v507 = vpop.xlane.xlu0 %506
    %v508 = vsel %vm447, %v489, 0.0
    %509 = vadd.xlane.f32.xlu0 %v508
    %v510 = vpop.xlane.xlu0 %509
    %v511 = vsel %vm447, %v491, 0.0
    %512 = vadd.xlane.f32.xlu0 %v511
    %v513 = vpop.xlane.xlu0 %512
    %v514 = vsel %vm447, %v493, 0.0
    %515 = vadd.xlane.f32.xlu0 %v514
    %v516 = vpop.xlane.xlu0 %515
    %v517 = vsel %vm447, %v495, 0.0
    %518 = vadd.xlane.f32.xlu0 %v517
    %v519 = vpop.xlane.xlu0 %518
    %v520 = vrcp.pop %v498
    %v521 = vrcp.pop %v501
    %v522 = vrcp.pop %v504
    %v523 = vrcp.pop %v507
    %v524 = vrcp.pop %v510
    %v525 = vrcp.pop %v513
    %v526 = vrcp.pop %v516
    %v527 = vrcp.pop %v519
    %v528 = vmul.f32 %v481, %v520
    %v529 = vmul.f32 %v483, %v521
    %v530 = vmul.f32 %v485, %v522
    %v531 = vmul.f32 %v487, %v523
    %v532 = vmul.f32 %v489, %v524
    %v533 = vmul.f32 %v491, %v525
    %v534 = vmul.f32 %v493, %v526
    %v535 = vmul.f32 %v495, %v527
    %v536 = vpack.c.bf16 %v529, %v528
    %v537 = vpack.c.bf16 %v531, %v530
    %v538 = vpack.c.bf16 %v533, %v532
    %v539 = vpack.c.bf16 %v535, %v534
    %540 = vrot.lane.b32.xlu0 %v323, 64
    %v541 = vpop.permute.xlu0 %540
    %v543 = vsel %vm447, %v536, 0
    %v546 = vsel %vm447, %v537, 0
    %vm548 = vcmask 1043456
    %v550 = vsel %vm548, %v541, 0
    %552 = vmatprep.subr.bf16.mxu0 0
    %553 = vmatpush1.bf16.msra.mxu0 %v550
    %554 = vmatprep.subr.bf16.mxu0 0
    %555 = vmatpush1.bf16.msra.mxu0 0
    %556 = vmatprep.subr.bf16.mxu0 0
    %557 = vmatpush1.bf16.msra.mxu0 0
    %558 = vmatprep.subr.bf16.mxu0 0
    %559 = vmatpush1.bf16.msra.mxu0 0
    %560 = vmatprep.subr.bf16.mxu0 0
    %561 = vmatpush1.bf16.msra.mxu0 0
    %562 = vmatprep.subr.bf16.mxu0 0
    %563 = vmatpush1.bf16.msra.mxu0 0
    %564 = vmatprep.subr.bf16.mxu0 0
    %565 = vmatpush1.bf16.msra.mxu0 0
    %566 = vmatprep.subr.bf16.mxu0 0
    %567 = vmatpush1.bf16.msra.mxu0 0
    %568 = vmatprep.subr.bf16.mxu0 0
    %569 = vmatpush1.bf16.msra.mxu0 0
    %570 = vmatprep.subr.bf16.mxu0 0
    %571 = vmatpush1.bf16.msra.mxu0 0
    %572 = vmatprep.subr.bf16.mxu0 0
    %573 = vmatpush1.bf16.msra.mxu0 0
    %574 = vmatprep.subr.bf16.mxu0 0
    %575 = vmatpush1.bf16.msra.mxu0 0
    %576 = vmatprep.subr.bf16.mxu0 0
    %577 = vmatpush1.bf16.msra.mxu0 0
    %578 = vmatprep.subr.bf16.mxu0 0
    %579 = vmatpush1.bf16.msra.mxu0 0
    %580 = vmatprep.subr.bf16.mxu0 0
    %581 = vmatpush1.bf16.msra.mxu0 0
    %582 = vmatprep.subr.bf16.mxu0 0
    %583 = vmatpush1.bf16.msra.mxu0 0
    %584 = vmatprep.mubr.bf16.mxu0 0
    %585 = vmatmul.mubr.bf16.gmra.mrb[0].mxu0 %v543
    %v586 = vpop.f32.mrb[0].mxu0
    %v587 = vadd.f32 0.0, %v586
    %v588 = vpop.f32.mrb[0].mxu0
    %v589 = vpop.f32.mrb[0].mxu0
    %v590 = vadd.f32 0.0, %v589
    %v591 = vpop.f32.mrb[0].mxu0
    %592 = vmatprep.mubr.bf16.mxu0 0
    %593 = vmatmul.mubr.bf16.gmra.mrb[0].mxu0 %v546
    %v594 = vpop.f32.mrb[0].mxu0
    %v595 = vadd.f32 0.0, %v594
    %v596 = vpop.f32.mrb[0].mxu0
    %v597 = vpop.f32.mrb[0].mxu0
    %v598 = vadd.f32 0.0, %v597
    %v599 = vpop.f32.mrb[0].mxu0
    %600 = vdwg.mxu0
    %601 = vrot.lane.b32.xlu0 %v324, 64
    %v602 = vpop.permute.xlu0 %601
    %v604 = vsel %vm447, %v538, 0
    %v607 = vsel %vm447, %v539, 0
    %v610 = vsel %vm548, %v602, 0
    %612 = vmatprep.subr.bf16.mxu0 0
    %613 = vmatpush1.bf16.msra.mxu0 %v610
    %614 = vmatprep.subr.bf16.mxu0 0
    %615 = vmatpush1.bf16.msra.mxu0 0
    %616 = vmatprep.subr.bf16.mxu0 0
    %617 = vmatpush1.bf16.msra.mxu0 0
    %618 = vmatprep.subr.bf16.mxu0 0
    %619 = vmatpush1.bf16.msra.mxu0 0
    %620 = vmatprep.subr.bf16.mxu0 0
    %621 = vmatpush1.bf16.msra.mxu0 0
    %622 = vmatprep.subr.bf16.mxu0 0
    %623 = vmatpush1.bf16.msra.mxu0 0
    %624 = vmatprep.subr.bf16.mxu0 0
    %625 = vmatpush1.bf16.msra.mxu0 0
    %626 = vmatprep.subr.bf16.mxu0 0
    %627 = vmatpush1.bf16.msra.mxu0 0
    %628 = vmatprep.subr.bf16.mxu0 0
    %629 = vmatpush1.bf16.msra.mxu0 0
    %630 = vmatprep.subr.bf16.mxu0 0
    %631 = vmatpush1.bf16.msra.mxu0 0
    %632 = vmatprep.subr.bf16.mxu0 0
    %633 = vmatpush1.bf16.msra.mxu0 0
    %634 = vmatprep.subr.bf16.mxu0 0
    %635 = vmatpush1.bf16.msra.mxu0 0
    %636 = vmatprep.subr.bf16.mxu0 0
    %637 = vmatpush1.bf16.msra.mxu0 0
    %638 = vmatprep.subr.bf16.mxu0 0
    %639 = vmatpush1.bf16.msra.mxu0 0
    %640 = vmatprep.subr.bf16.mxu0 0
    %641 = vmatpush1.bf16.msra.mxu0 0
    %642 = vmatprep.subr.bf16.mxu0 0
    %643 = vmatpush1.bf16.msra.mxu0 0
    %644 = vmatprep.mubr.bf16.mxu0 0
    %645 = vmatmul.mubr.bf16.gmra.mrb[0].mxu0 %v604
    %v646 = vpop.f32.mrb[0].mxu0
    %v647 = vadd.f32 0.0, %v646
    %v648 = vpop.f32.mrb[0].mxu0
    %v649 = vpop.f32.mrb[0].mxu0
    %v650 = vadd.f32 0.0, %v649
    %v651 = vpop.f32.mrb[0].mxu0
    %652 = vmatprep.mubr.bf16.mxu0 0
    %653 = vmatmul.mubr.bf16.gmra.mrb[0].mxu0 %v607
    %v654 = vpop.f32.mrb[0].mxu0
    %v655 = vadd.f32 0.0, %v654
    %v656 = vpop.f32.mrb[0].mxu0
    %v657 = vpop.f32.mrb[0].mxu0
    %v658 = vadd.f32 0.0, %v657
    %v659 = vpop.f32.mrb[0].mxu0
    %660 = vdwg.mxu0
    %v661 = vmul.f32 %v587, %v294
    %v662 = vmul.f32 %v590, %v298
    %v663 = vmul.f32 %v595, %v302
    %v664 = vmul.f32 %v598, %v306
    %v665 = vmul.f32 %v647, %v294
    %v666 = vmul.f32 %v650, %v298
    %v667 = vmul.f32 %v655, %v302
    %v668 = vmul.f32 %v658, %v306
    %v669 = vsel %vm167, %v661, 0.0
    %v670 = vsel %vm167, %v662, 0.0
    %v671 = vadd.f32 %v669, %v670
    %v672 = vsel %vm167, %v663, 0.0
    %v673 = vadd.f32 %v671, %v672
    %v674 = vsel %vm167, %v664, 0.0
    %v675 = vadd.f32 %v673, %v674
    %v676 = vsel %vm167, %v665, 0.0
    %v677 = vsel %vm167, %v666, 0.0
    %v678 = vadd.f32 %v676, %v677
    %v679 = vsel %vm167, %v667, 0.0
    %v680 = vadd.f32 %v678, %v679
    %v681 = vsel %vm167, %v668, 0.0
    %v682 = vadd.f32 %v680, %v681
    %v683 = vadd.f32 %v150, %v675
    %v684 = vadd.f32 %v151, %v682
    %v685 = vsel %vm167, %v683, 0.0
    %686 = vadd.xlane.f32.xlu0 %v685
    %v687 = vpop.xlane.xlu0 %686
    %v688 = vsel %vm167, %v684, 0.0
    %689 = vadd.xlane.f32.xlu0 %v688
    %v690 = vpop.xlane.xlu0 %689
    %v691 = vmul.f32 %v687, %v174
    %v692 = vmul.f32 %v690, %v174
    %v693 = vsub.f32 %v683, %v691
    %v694 = vsub.f32 %v684, %v692
    %v695 = vmul.f32 %v693, %v693
    %v696 = vmul.f32 %v694, %v694
    %v697 = vsel %vm167, %v695, 0.0
    %698 = vadd.xlane.f32.xlu0 %v697
    %v699 = vpop.xlane.xlu0 %698
    %v700 = vsel %vm167, %v696, 0.0
    %701 = vadd.xlane.f32.xlu0 %v700
    %v702 = vpop.xlane.xlu0 %701
    %v703 = vmul.f32 %v699, %v174
    %v704 = vmul.f32 %v702, %v174
    %v705 = vadd.f32 %v703, 1e-05
    %v706 = vadd.f32 %v704, 1e-05
    %v707 = vrsqrt.pop %v705
    %v708 = vrsqrt.pop %v706
    %v709 = vmul.f32 %v693, %v707
    %v710 = vmul.f32 %v694, %v708
    %v711 = vlaneseq
    %v712 = vshrl.u32 %v711, 7
    %v713 = vsub.s32 4, %v712
    %v714 = vrot.slane %v121, %v713
    %v715 = vmul.f32 %v709, %v714
    %v716 = vmul.f32 %v710, %v714
    %v717 = vlaneseq
    %v718 = vshrl.u32 %v717, 7
    %v719 = vsub.s32 5, %v718
    %v720 = vrot.slane %v121, %v719
    %v721 = vadd.f32 %v715, %v720
    %v722 = vadd.f32 %v716, %v720
    %v723 = vsel %vm167, %v721, 0.0
    %724 = vadd.xlane.f32.xlu0 %v723
    %v725 = vpop.xlane.xlu0 %724
    %v726 = vsel %vm167, %v722, 0.0
    %727 = vadd.xlane.f32.xlu0 %v726
    %v728 = vpop.xlane.xlu0 %727
    %v729 = vmul.f32 %v725, %v174
    %v730 = vmul.f32 %v728, %v174
    %v731 = vsub.f32 %v721, %v729
    %v732 = vsub.f32 %v722, %v730
    %v733 = vmul.f32 %v731, %v731
    %v734 = vmul.f32 %v732, %v732
    %v735 = vsel %vm167, %v733, 0.0
    %736 = vadd.xlane.f32.xlu0 %v735
    %v737 = vpop.xlane.xlu0 %736
    %v738 = vsel %vm167, %v734, 0.0
    %739 = vadd.xlane.f32.xlu0 %v738
    %v740 = vpop.xlane.xlu0 %739
    %v741 = vmul.f32 %v737, %v174
    %v742 = vmul.f32 %v740, %v174
    %v743 = vadd.f32 %v741, 1e-05
    %v744 = vadd.f32 %v742, 1e-05
    %v745 = vrsqrt.pop %v743
    %v746 = vrsqrt.pop %v744
    %v747 = vmul.f32 %v731, %v745
    %v748 = vmul.f32 %v732, %v746
    %v749 = vlaneseq
    %v750 = vshrl.u32 %v749, 7
    %v751 = vsub.s32 2, %v750
    %v752 = vrot.slane %v121, %v751
    %v753 = vmul.f32 %v747, %v752
    %v754 = vmul.f32 %v748, %v752
    %v755 = vlaneseq
    %v756 = vshrl.u32 %v755, 7
    %v757 = vsub.s32 3, %v756
    %v758 = vrot.slane %v121, %v757
    %v759 = vadd.f32 %v753, %v758
    %v760 = vadd.f32 %v754, %v758
    %v761 = vsel %vm167, %v152, 0.0
    %762 = vadd.xlane.f32.xlu0 %v761
    %v763 = vpop.xlane.xlu0 %762
    %v764 = vsel %vm167, %v153, 0.0
    %765 = vadd.xlane.f32.xlu0 %v764
    %v766 = vpop.xlane.xlu0 %765
    %v767 = vmul.f32 %v763, %v174
    %v768 = vmul.f32 %v766, %v174
    %v769 = vsub.f32 %v152, %v767
    %v770 = vsub.f32 %v153, %v768
    %v771 = vmul.f32 %v769, %v769
    %v772 = vmul.f32 %v770, %v770
    %v773 = vsel %vm167, %v771, 0.0
    %774 = vadd.xlane.f32.xlu0 %v773
    %v775 = vpop.xlane.xlu0 %774
    %v776 = vsel %vm167, %v772, 0.0
    %777 = vadd.xlane.f32.xlu0 %v776
    %v778 = vpop.xlane.xlu0 %777
    %v779 = vmul.f32 %v775, %v174
    %v780 = vmul.f32 %v778, %v174
    %v781 = vadd.f32 %v779, 1e-05
    %v782 = vadd.f32 %v780, 1e-05
    %v783 = vrsqrt.pop %v781
    %v784 = vrsqrt.pop %v782
    %v785 = vmul.f32 %v769, %v783
    %v786 = vmul.f32 %v770, %v784
    %v787 = vmul.f32 %v785, %v752
    %v788 = vmul.f32 %v786, %v752
    %v789 = vadd.f32 %v787, %v758
    %v790 = vadd.f32 %v788, %v758
    %v791 = vpack.c.bf16 %v760, %v759
    %792 = vrot.lane.b32.xlu0 %v216, 32
    %v793 = vpop.permute.xlu0 %792
    %794 = vrot.lane.b32.xlu0 %v217, 32
    %v795 = vpop.permute.xlu0 %794
    %v799 = vsel %vm167, %v791, 0
    %801 = vmatprep.subr.bf16.mxu0 0
    %802 = vmatpush1.bf16.msra.mxu0 %v793
    %803 = vmatprep.subr.bf16.mxu0 0
    %804 = vmatpush1.bf16.msra.mxu0 %v795
    %805 = vmatprep.subr.bf16.mxu0 0
    %806 = vmatpush1.bf16.msra.mxu0 0
    %807 = vmatprep.subr.bf16.mxu0 0
    %808 = vmatpush1.bf16.msra.mxu0 0
    %809 = vmatprep.subr.bf16.mxu0 0
    %810 = vmatpush1.bf16.msra.mxu0 0
    %811 = vmatprep.subr.bf16.mxu0 0
    %812 = vmatpush1.bf16.msra.mxu0 0
    %813 = vmatprep.subr.bf16.mxu0 0
    %814 = vmatpush1.bf16.msra.mxu0 0
    %815 = vmatprep.subr.bf16.mxu0 0
    %816 = vmatpush1.bf16.msra.mxu0 0
    %817 = vmatprep.subr.bf16.mxu0 0
    %818 = vmatpush1.bf16.msra.mxu0 0
    %819 = vmatprep.subr.bf16.mxu0 0
    %820 = vmatpush1.bf16.msra.mxu0 0
    %821 = vmatprep.subr.bf16.mxu0 0
    %822 = vmatpush1.bf16.msra.mxu0 0
    %823 = vmatprep.subr.bf16.mxu0 0
    %824 = vmatpush1.bf16.msra.mxu0 0
    %825 = vmatprep.subr.bf16.mxu0 0
    %826 = vmatpush1.bf16.msra.mxu0 0
    %827 = vmatprep.subr.bf16.mxu0 0
    %828 = vmatpush1.bf16.msra.mxu0 0
    %829 = vmatprep.subr.bf16.mxu0 0
    %830 = vmatpush1.bf16.msra.mxu0 0
    %831 = vmatprep.subr.bf16.mxu0 0
    %832 = vmatpush1.bf16.msra.mxu0 0
    %833 = vmatprep.mubr.bf16.mxu0 0
    %834 = vmatmul.mubr.bf16.gmra.mrb[0].mxu0 %v799
    %v835 = vpop.f32.mrb[0].mxu0
    %v836 = vadd.f32 0.0, %v835
    %v837 = vpop.f32.mrb[0].mxu0
    %v838 = vpop.f32.mrb[0].mxu0
    %v839 = vadd.f32 0.0, %v838
    %v840 = vpop.f32.mrb[0].mxu0
    %841 = vdwg.mxu0
    %v842 = vpack.c.bf16 %v790, %v789
    %v843 = vunpack.c.h.b16 %v123
    %v844 = vunpack.c.h.b16 %v124
    %v845 = vunpack.c.h.b16 %v125
    %v846 = vunpack.c.h.b16 %v126
    %v847 = vpack.c.b16 %v844, %v843
    %v848 = vpack.c.b16 %v846, %v845
    %v852 = vsel %vm167, %v842, 0
    %854 = vmatprep.subr.bf16.mxu0 0
    %855 = vmatpush1.bf16.msra.mxu0 %v847
    %856 = vmatprep.subr.bf16.mxu0 0
    %857 = vmatpush1.bf16.msra.mxu0 %v848
    %858 = vmatprep.subr.bf16.mxu0 0
    %859 = vmatpush1.bf16.msra.mxu0 0
    %860 = vmatprep.subr.bf16.mxu0 0
    %861 = vmatpush1.bf16.msra.mxu0 0
    %862 = vmatprep.subr.bf16.mxu0 0
    %863 = vmatpush1.bf16.msra.mxu0 0
    %864 = vmatprep.subr.bf16.mxu0 0
    %865 = vmatpush1.bf16.msra.mxu0 0
    %866 = vmatprep.subr.bf16.mxu0 0
    %867 = vmatpush1.bf16.msra.mxu0 0
    %868 = vmatprep.subr.bf16.mxu0 0
    %869 = vmatpush1.bf16.msra.mxu0 0
    %870 = vmatprep.subr.bf16.mxu0 0
    %871 = vmatpush1.bf16.msra.mxu0 0
    %872 = vmatprep.subr.bf16.mxu0 0
    %873 = vmatpush1.bf16.msra.mxu0 0
    %874 = vmatprep.subr.bf16.mxu0 0
    %875 = vmatpush1.bf16.msra.mxu0 0
    %876 = vmatprep.subr.bf16.mxu0 0
    %877 = vmatpush1.bf16.msra.mxu0 0
    %878 = vmatprep.subr.bf16.mxu0 0
    %879 = vmatpush1.bf16.msra.mxu0 0
    %880 = vmatprep.subr.bf16.mxu0 0
    %881 = vmatpush1.bf16.msra.mxu0 0
    %882 = vmatprep.subr.bf16.mxu0 0
    %883 = vmatpush1.bf16.msra.mxu0 0
    %884 = vmatprep.subr.bf16.mxu0 0
    %885 = vmatpush1.bf16.msra.mxu0 0
    %886 = vmatprep.mubr.bf16.mxu0 0
    %887 = vmatmul.mubr.bf16.gmra.mrb[0].mxu0 %v852
    %v888 = vpop.f32.mrb[0].mxu0
    %v889 = vadd.f32 0.0, %v888
    %v890 = vpop.f32.mrb[0].mxu0
    %v891 = vpop.f32.mrb[0].mxu0
    %v892 = vadd.f32 0.0, %v891
    %v893 = vpop.f32.mrb[0].mxu0
    %894 = vdwg.mxu0
    %v895 = vmul.f32 %v836, 0.35355338
    %v896 = vmul.f32 %v839, 0.35355338
    %v897 = vmul.f32 %v895, %v294
    %v898 = vmul.f32 %v895, %v298
    %v899 = vmul.f32 %v895, %v302
    %v900 = vmul.f32 %v895, %v306
    %v901 = vmul.f32 %v896, %v294
    %v902 = vmul.f32 %v896, %v298
    %v903 = vmul.f32 %v896, %v302
    %v904 = vmul.f32 %v896, %v306
    %v905 = vpack.c.bf16 %v898, %v897
    %v906 = vpack.c.bf16 %v900, %v899
    %v907 = vpack.c.bf16 %v902, %v901
    %v908 = vpack.c.bf16 %v904, %v903
    %v909 = vpack.c.bf16 %v889, %v889
    %v910 = vpack.c.bf16 %v892, %v892
    %v912 = vsel %vm167, %v905, 0
    %v915 = vsel %vm167, %v906, 0
    %v918 = vsel %vm167, %v909, 0
    %920 = vmatprep.subr.bf16.mxu0 0
    %921 = vmatpush1.bf16.xpose.msra.mxu0 %v918
    %922 = vmatprep.subr.bf16.mxu0 0
    %923 = vmatpush1.bf16.xpose.msra.mxu0 0
    %924 = vmatprep.subr.bf16.mxu0 0
    %925 = vmatpush1.bf16.xpose.msra.mxu0 0
    %926 = vmatprep.subr.bf16.mxu0 0
    %927 = vmatpush1.bf16.xpose.msra.mxu0 0
    %928 = vmatprep.subr.bf16.mxu0 0
    %929 = vmatpush1.bf16.xpose.msra.mxu0 0
    %930 = vmatprep.subr.bf16.mxu0 0
    %931 = vmatpush1.bf16.xpose.msra.mxu0 0
    %932 = vmatprep.subr.bf16.mxu0 0
    %933 = vmatpush1.bf16.xpose.msra.mxu0 0
    %934 = vmatprep.subr.bf16.mxu0 0
    %935 = vmatpush1.bf16.xpose.msra.mxu0 0
    %936 = vmatprep.subr.bf16.mxu0 0
    %937 = vmatpush1.bf16.xpose.msra.mxu0 0
    %938 = vmatprep.subr.bf16.mxu0 0
    %939 = vmatpush1.bf16.xpose.msra.mxu0 0
    %940 = vmatprep.subr.bf16.mxu0 0
    %941 = vmatpush1.bf16.xpose.msra.mxu0 0
    %942 = vmatprep.subr.bf16.mxu0 0
    %943 = vmatpush1.bf16.xpose.msra.mxu0 0
    %944 = vmatprep.subr.bf16.mxu0 0
    %945 = vmatpush1.bf16.xpose.msra.mxu0 0
    %946 = vmatprep.subr.bf16.mxu0 0
    %947 = vmatpush1.bf16.xpose.msra.mxu0 0
    %948 = vmatprep.subr.bf16.mxu0 0
    %949 = vmatpush1.bf16.xpose.msra.mxu0 0
    %950 = vmatprep.subr.bf16.mxu0 0
    %951 = vmatpush1.bf16.xpose.msra.mxu0 0
    %952 = vmatprep.mubr.bf16.mxu0 0
    %953 = vmatmul.mubr.bf16.gmra.mrb[0].mxu0 %v912
    %v954 = vpop.f32.mrb[0].mxu0
    %v955 = vadd.f32 0.0, %v954
    %v956 = vpop.f32.mrb[0].mxu0
    %v957 = vpop.f32.mrb[0].mxu0
    %v958 = vadd.f32 0.0, %v957
    %v959 = vpop.f32.mrb[0].mxu0
    %960 = vmatprep.mubr.bf16.mxu0 0
    %961 = vmatmul.mubr.bf16.gmra.mrb[0].mxu0 %v915
    %v962 = vpop.f32.mrb[0].mxu0
    %v963 = vadd.f32 0.0, %v962
    %v964 = vpop.f32.mrb[0].mxu0
    %v965 = vpop.f32.mrb[0].mxu0
    %v966 = vadd.f32 0.0, %v965
    %v967 = vpop.f32.mrb[0].mxu0
    %968 = vdwg.mxu0
    %v970 = vsel %vm167, %v907, 0
    %v973 = vsel %vm167, %v908, 0
    %v976 = vsel %vm167, %v910, 0
    %978 = vmatprep.subr.bf16.mxu0 0
    %979 = vmatpush1.bf16.xpose.msra.mxu0 %v976
    %980 = vmatprep.subr.bf16.mxu0 0
    %981 = vmatpush1.bf16.xpose.msra.mxu0 0
    %982 = vmatprep.subr.bf16.mxu0 0
    %983 = vmatpush1.bf16.xpose.msra.mxu0 0
    %984 = vmatprep.subr.bf16.mxu0 0
    %985 = vmatpush1.bf16.xpose.msra.mxu0 0
    %986 = vmatprep.subr.bf16.mxu0 0
    %987 = vmatpush1.bf16.xpose.msra.mxu0 0
    %988 = vmatprep.subr.bf16.mxu0 0
    %989 = vmatpush1.bf16.xpose.msra.mxu0 0
    %990 = vmatprep.subr.bf16.mxu0 0
    %991 = vmatpush1.bf16.xpose.msra.mxu0 0
    %992 = vmatprep.subr.bf16.mxu0 0
    %993 = vmatpush1.bf16.xpose.msra.mxu0 0
    %994 = vmatprep.subr.bf16.mxu0 0
    %995 = vmatpush1.bf16.xpose.msra.mxu0 0
    %996 = vmatprep.subr.bf16.mxu0 0
    %997 = vmatpush1.bf16.xpose.msra.mxu0 0
    %998 = vmatprep.subr.bf16.mxu0 0
    %999 = vmatpush1.bf16.xpose.msra.mxu0 0
    %1000 = vmatprep.subr.bf16.mxu0 0
    %1001 = vmatpush1.bf16.xpose.msra.mxu0 0
    %1002 = vmatprep.subr.bf16.mxu0 0
    %1003 = vmatpush1.bf16.xpose.msra.mxu0 0
    %1004 = vmatprep.subr.bf16.mxu0 0
    %1005 = vmatpush1.bf16.xpose.msra.mxu0 0
    %1006 = vmatprep.subr.bf16.mxu0 0
    %1007 = vmatpush1.bf16.xpose.msra.mxu0 0
    %1008 = vmatprep.subr.bf16.mxu0 0
    %1009 = vmatpush1.bf16.xpose.msra.mxu0 0
    %1010 = vmatprep.mubr.bf16.mxu0 0
    %1011 = vmatmul.mubr.bf16.gmra.mrb[0].mxu0 %v970
    %v1012 = vpop.f32.mrb[0].mxu0
    %v1013 = vadd.f32 0.0, %v1012
    %v1014 = vpop.f32.mrb[0].mxu0
    %v1015 = vpop.f32.mrb[0].mxu0
    %v1016 = vadd.f32 0.0, %v1015
    %v1017 = vpop.f32.mrb[0].mxu0
    %1018 = vmatprep.mubr.bf16.mxu0 0
    %1019 = vmatmul.mubr.bf16.gmra.mrb[0].mxu0 %v973
    %v1020 = vpop.f32.mrb[0].mxu0
    %v1021 = vadd.f32 0.0, %v1020
    %v1022 = vpop.f32.mrb[0].mxu0
    %v1023 = vpop.f32.mrb[0].mxu0
    %v1024 = vadd.f32 0.0, %v1023
    %v1025 = vpop.f32.mrb[0].mxu0
    %1026 = vdwg.mxu0
    %v1027 = vsel %vm447, %v955, -inf
    %1028 = vmax.xlane.f32.xlu0 %v1027
    %v1029 = vpop.xlane.xlu0 %1028
    %v1030 = vsel %vm447, %v958, -inf
    %1031 = vmax.xlane.f32.xlu0 %v1030
    %v1032 = vpop.xlane.xlu0 %1031
    %v1033 = vsel %vm447, %v963, -inf
    %1034 = vmax.xlane.f32.xlu0 %v1033
    %v1035 = vpop.xlane.xlu0 %1034
    %v1036 = vsel %vm447, %v966, -inf
    %1037 = vmax.xlane.f32.xlu0 %v1036
    %v1038 = vpop.xlane.xlu0 %1037
    %v1039 = vsel %vm447, %v1013, -inf
    %1040 = vmax.xlane.f32.xlu0 %v1039
    %v1041 = vpop.xlane.xlu0 %1040
    %v1042 = vsel %vm447, %v1016, -inf
    %1043 = vmax.xlane.f32.xlu0 %v1042
    %v1044 = vpop.xlane.xlu0 %1043
    %v1045 = vsel %vm447, %v1021, -inf
    %1046 = vmax.xlane.f32.xlu0 %v1045
    %v1047 = vpop.xlane.xlu0 %1046
    %v1048 = vsel %vm447, %v1024, -inf
    %1049 = vmax.xlane.f32.xlu0 %v1048
    %v1050 = vpop.xlane.xlu0 %1049
    %v1051 = vsub.f32 %v955, %v1029
    %v1052 = vsub.f32 %v958, %v1032
    %v1053 = vsub.f32 %v963, %v1035
    %v1054 = vsub.f32 %v966, %v1038
    %v1055 = vsub.f32 %v1013, %v1041
    %v1056 = vsub.f32 %v1016, %v1044
    %v1057 = vsub.f32 %v1021, %v1047
    %v1058 = vsub.f32 %v1024, %v1050
    %v1059 = vmul.f32 %v1051, 1.442695
    %v1060 = vpow.pop %v1059
    %v1061 = vmul.f32 %v1052, 1.442695
    %v1062 = vpow.pop %v1061
    %v1063 = vmul.f32 %v1053, 1.442695
    %v1064 = vpow.pop %v1063
    %v1065 = vmul.f32 %v1054, 1.442695
    %v1066 = vpow.pop %v1065
    %v1067 = vmul.f32 %v1055, 1.442695
    %v1068 = vpow.pop %v1067
    %v1069 = vmul.f32 %v1056, 1.442695
    %v1070 = vpow.pop %v1069
    %v1071 = vmul.f32 %v1057, 1.442695
    %v1072 = vpow.pop %v1071
    %v1073 = vmul.f32 %v1058, 1.442695
    %v1074 = vpow.pop %v1073
    %v1075 = vsel %vm447, %v1060, 0.0
    %1076 = vadd.xlane.f32.xlu0 %v1075
    %v1077 = vpop.xlane.xlu0 %1076
    %v1078 = vsel %vm447, %v1062, 0.0
    %1079 = vadd.xlane.f32.xlu0 %v1078
    %v1080 = vpop.xlane.xlu0 %1079
    %v1081 = vsel %vm447, %v1064, 0.0
    %1082 = vadd.xlane.f32.xlu0 %v1081
    %v1083 = vpop.xlane.xlu0 %1082
    %v1084 = vsel %vm447, %v1066, 0.0
    %1085 = vadd.xlane.f32.xlu0 %v1084
    %v1086 = vpop.xlane.xlu0 %1085
    %v1087 = vsel %vm447, %v1068, 0.0
    %1088 = vadd.xlane.f32.xlu0 %v1087
    %v1089 = vpop.xlane.xlu0 %1088
    %v1090 = vsel %vm447, %v1070, 0.0
    %1091 = vadd.xlane.f32.xlu0 %v1090
    %v1092 = vpop.xlane.xlu0 %1091
    %v1093 = vsel %vm447, %v1072, 0.0
    %1094 = vadd.xlane.f32.xlu0 %v1093
    %v1095 = vpop.xlane.xlu0 %1094
    %v1096 = vsel %vm447, %v1074, 0.0
    %1097 = vadd.xlane.f32.xlu0 %v1096
    %v1098 = vpop.xlane.xlu0 %1097
    %v1099 = vrcp.pop %v1077
    %v1100 = vrcp.pop %v1080
    %v1101 = vrcp.pop %v1083
    %v1102 = vrcp.pop %v1086
    %v1103 = vrcp.pop %v1089
    %v1104 = vrcp.pop %v1092
    %v1105 = vrcp.pop %v1095
    %v1106 = vrcp.pop %v1098
    %v1107 = vmul.f32 %v1060, %v1099
    %v1108 = vmul.f32 %v1062, %v1100
    %v1109 = vmul.f32 %v1064, %v1101
    %v1110 = vmul.f32 %v1066, %v1102
    %v1111 = vmul.f32 %v1068, %v1103
    %v1112 = vmul.f32 %v1070, %v1104
    %v1113 = vmul.f32 %v1072, %v1105
    %v1114 = vmul.f32 %v1074, %v1106
    %v1115 = vpack.c.bf16 %v1108, %v1107
    %v1116 = vpack.c.bf16 %v1110, %v1109
    %v1117 = vpack.c.bf16 %v1112, %v1111
    %v1118 = vpack.c.bf16 %v1114, %v1113
    %1120 = vrot.lane.b32.xlu0 %v909, 96
    %v1121 = vpop.permute.xlu0 %1120
    %v1123 = vsel %vm447, %v1115, 0
    %v1126 = vsel %vm447, %v1116, 0
    %v1129 = vsel %vm548, %v1121, 0
    %1131 = vmatprep.subr.bf16.mxu0 0
    %1132 = vmatpush1.bf16.msra.mxu0 %v1129
    %1133 = vmatprep.subr.bf16.mxu0 0
    %1134 = vmatpush1.bf16.msra.mxu0 0
    %1135 = vmatprep.subr.bf16.mxu0 0
    %1136 = vmatpush1.bf16.msra.mxu0 0
    %1137 = vmatprep.subr.bf16.mxu0 0
    %1138 = vmatpush1.bf16.msra.mxu0 0
    %1139 = vmatprep.subr.bf16.mxu0 0
    %1140 = vmatpush1.bf16.msra.mxu0 0
    %1141 = vmatprep.subr.bf16.mxu0 0
    %1142 = vmatpush1.bf16.msra.mxu0 0
    %1143 = vmatprep.subr.bf16.mxu0 0
    %1144 = vmatpush1.bf16.msra.mxu0 0
    %1145 = vmatprep.subr.bf16.mxu0 0
    %1146 = vmatpush1.bf16.msra.mxu0 0
    %1147 = vmatprep.subr.bf16.mxu0 0
    %1148 = vmatpush1.bf16.msra.mxu0 0
    %1149 = vmatprep.subr.bf16.mxu0 0
    %1150 = vmatpush1.bf16.msra.mxu0 0
    %1151 = vmatprep.subr.bf16.mxu0 0
    %1152 = vmatpush1.bf16.msra.mxu0 0
    %1153 = vmatprep.subr.bf16.mxu0 0
    %1154 = vmatpush1.bf16.msra.mxu0 0
    %1155 = vmatprep.subr.bf16.mxu0 0
    %1156 = vmatpush1.bf16.msra.mxu0 0
    %1157 = vmatprep.subr.bf16.mxu0 0
    %1158 = vmatpush1.bf16.msra.mxu0 0
    %1159 = vmatprep.subr.bf16.mxu0 0
    %1160 = vmatpush1.bf16.msra.mxu0 0
    %1161 = vmatprep.subr.bf16.mxu0 0
    %1162 = vmatpush1.bf16.msra.mxu0 0
    %1163 = vmatprep.mubr.bf16.mxu0 0
    %1164 = vmatmul.mubr.bf16.gmra.mrb[0].mxu0 %v1123
    %v1165 = vpop.f32.mrb[0].mxu0
    %v1166 = vadd.f32 0.0, %v1165
    %v1167 = vpop.f32.mrb[0].mxu0
    %v1168 = vpop.f32.mrb[0].mxu0
    %v1169 = vadd.f32 0.0, %v1168
    %v1170 = vpop.f32.mrb[0].mxu0
    %1171 = vmatprep.mubr.bf16.mxu0 0
    %1172 = vmatmul.mubr.bf16.gmra.mrb[0].mxu0 %v1126
    %v1173 = vpop.f32.mrb[0].mxu0
    %v1174 = vadd.f32 0.0, %v1173
    %v1175 = vpop.f32.mrb[0].mxu0
    %v1176 = vpop.f32.mrb[0].mxu0
    %v1177 = vadd.f32 0.0, %v1176
    %v1178 = vpop.f32.mrb[0].mxu0
    %1179 = vdwg.mxu0
    %1181 = vrot.lane.b32.xlu0 %v910, 96
    %v1182 = vpop.permute.xlu0 %1181
    %v1184 = vsel %vm447, %v1117, 0
    %v1187 = vsel %vm447, %v1118, 0
    %v1190 = vsel %vm548, %v1182, 0
    %1192 = vmatprep.subr.bf16.mxu0 0
    %1193 = vmatpush1.bf16.msra.mxu0 %v1190
    %1194 = vmatprep.subr.bf16.mxu0 0
    %1195 = vmatpush1.bf16.msra.mxu0 0
    %1196 = vmatprep.subr.bf16.mxu0 0
    %1197 = vmatpush1.bf16.msra.mxu0 0
    %1198 = vmatprep.subr.bf16.mxu0 0
    %1199 = vmatpush1.bf16.msra.mxu0 0
    %1200 = vmatprep.subr.bf16.mxu0 0
    %1201 = vmatpush1.bf16.msra.mxu0 0
    %1202 = vmatprep.subr.bf16.mxu0 0
    %1203 = vmatpush1.bf16.msra.mxu0 0
    %1204 = vmatprep.subr.bf16.mxu0 0
    %1205 = vmatpush1.bf16.msra.mxu0 0
    %1206 = vmatprep.subr.bf16.mxu0 0
    %1207 = vmatpush1.bf16.msra.mxu0 0
    %1208 = vmatprep.subr.bf16.mxu0 0
    %1209 = vmatpush1.bf16.msra.mxu0 0
    %1210 = vmatprep.subr.bf16.mxu0 0
    %1211 = vmatpush1.bf16.msra.mxu0 0
    %1212 = vmatprep.subr.bf16.mxu0 0
    %1213 = vmatpush1.bf16.msra.mxu0 0
    %1214 = vmatprep.subr.bf16.mxu0 0
    %1215 = vmatpush1.bf16.msra.mxu0 0
    %1216 = vmatprep.subr.bf16.mxu0 0
    %1217 = vmatpush1.bf16.msra.mxu0 0
    %1218 = vmatprep.subr.bf16.mxu0 0
    %1219 = vmatpush1.bf16.msra.mxu0 0
    %1220 = vmatprep.subr.bf16.mxu0 0
    %1221 = vmatpush1.bf16.msra.mxu0 0
    %1222 = vmatprep.subr.bf16.mxu0 0
    %1223 = vmatpush1.bf16.msra.mxu0 0
    %1224 = vmatprep.mubr.bf16.mxu0 0
    %1225 = vmatmul.mubr.bf16.gmra.mrb[0].mxu0 %v1184
    %v1226 = vpop.f32.mrb[0].mxu0
    %v1227 = vadd.f32 0.0, %v1226
    %v1228 = vpop.f32.mrb[0].mxu0
    %v1229 = vpop.f32.mrb[0].mxu0
    %v1230 = vadd.f32 0.0, %v1229
    %v1231 = vpop.f32.mrb[0].mxu0
    %1232 = vmatprep.mubr.bf16.mxu0 0
    %1233 = vmatmul.mubr.bf16.gmra.mrb[0].mxu0 %v1187
    %v1234 = vpop.f32.mrb[0].mxu0
    %v1235 = vadd.f32 0.0, %v1234
    %v1236 = vpop.f32.mrb[0].mxu0
    %v1237 = vpop.f32.mrb[0].mxu0
    %v1238 = vadd.f32 0.0, %v1237
    %v1239 = vpop.f32.mrb[0].mxu0
    %1240 = vdwg.mxu0
    %v1241 = vmul.f32 %v1166, %v294
    %v1242 = vmul.f32 %v1169, %v298
    %v1243 = vmul.f32 %v1174, %v302
    %v1244 = vmul.f32 %v1177, %v306
    %v1245 = vmul.f32 %v1227, %v294
    %v1246 = vmul.f32 %v1230, %v298
    %v1247 = vmul.f32 %v1235, %v302
    %v1248 = vmul.f32 %v1238, %v306
    %v1249 = vsel %vm167, %v1241, 0.0
    %v1250 = vsel %vm167, %v1242, 0.0
    %v1251 = vadd.f32 %v1249, %v1250
    %v1252 = vsel %vm167, %v1243, 0.0
    %v1253 = vadd.f32 %v1251, %v1252
    %v1254 = vsel %vm167, %v1244, 0.0
    %v1255 = vadd.f32 %v1253, %v1254
    %v1256 = vsel %vm167, %v1245, 0.0
    %v1257 = vsel %vm167, %v1246, 0.0
    %v1258 = vadd.f32 %v1256, %v1257
    %v1259 = vsel %vm167, %v1247, 0.0
    %v1260 = vadd.f32 %v1258, %v1259
    %v1261 = vsel %vm167, %v1248, 0.0
    %v1262 = vadd.f32 %v1260, %v1261
    %v1263 = vadd.f32 %v721, %v1255
    %v1264 = vadd.f32 %v722, %v1262
    %v1265 = vsel %vm167, %v1263, 0.0
    %1266 = vadd.xlane.f32.xlu0 %v1265
    %v1267 = vpop.xlane.xlu0 %1266
    %v1268 = vsel %vm167, %v1264, 0.0
    %1269 = vadd.xlane.f32.xlu0 %v1268
    %v1270 = vpop.xlane.xlu0 %1269
    %v1271 = vmul.f32 %v1267, %v174
    %v1272 = vmul.f32 %v1270, %v174
    %v1273 = vsub.f32 %v1263, %v1271
    %v1274 = vsub.f32 %v1264, %v1272
    %v1275 = vmul.f32 %v1273, %v1273
    %v1276 = vmul.f32 %v1274, %v1274
    %v1277 = vsel %vm167, %v1275, 0.0
    %1278 = vadd.xlane.f32.xlu0 %v1277
    %v1279 = vpop.xlane.xlu0 %1278
    %v1280 = vsel %vm167, %v1276, 0.0
    %1281 = vadd.xlane.f32.xlu0 %v1280
    %v1282 = vpop.xlane.xlu0 %1281
    %v1283 = vmul.f32 %v1279, %v174
    %v1284 = vmul.f32 %v1282, %v174
    %v1285 = vadd.f32 %v1283, 1e-05
    %v1286 = vadd.f32 %v1284, 1e-05
    %v1287 = vrsqrt.pop %v1285
    %v1288 = vrsqrt.pop %v1286
    %v1289 = vmul.f32 %v1273, %v1287
    %v1290 = vmul.f32 %v1274, %v1288
    %v1291 = vlaneseq
    %v1292 = vshrl.u32 %v1291, 7
    %v1293 = vsub.s32 6, %v1292
    %v1294 = vrot.slane %v121, %v1293
    %v1295 = vmul.f32 %v1289, %v1294
    %v1296 = vmul.f32 %v1290, %v1294
    %v1297 = vlaneseq
    %v1298 = vshrl.u32 %v1297, 7
    %v1299 = vsub.s32 7, %v1298
    %v1300 = vrot.slane %v121, %v1299
    %v1301 = vadd.f32 %v1295, %v1300
    %v1302 = vadd.f32 %v1296, %v1300
    %v1303 = vpack.c.bf16 %v1302, %v1301
    %v1305 = vlaneseq
    %v1306 = vshrl.u32 %v1305, 7
    %v1307 = vsub.s32 0, %v1306
    %v1308 = vrot.slane %v131, %v1307
    %v1314 = vunpack.c.l.b16 %v127
    %v1315 = vunpack.c.l.b16 %v128
    %v1316 = vunpack.c.l.b16 %v129
    %v1317 = vunpack.c.l.b16 %v130
    %v1318 = vpack.c.b16 %v1315, %v1314
    %v1319 = vpack.c.b16 %v1317, %v1316
    %v1323 = vsel %vm167, %v1303, 0
    %1325 = vmatprep.subr.bf16.mxu0 0
    %1326 = vmatpush1.bf16.msra.mxu0 %v1318
    %1327 = vmatprep.subr.bf16.mxu0 0
    %1328 = vmatpush1.bf16.msra.mxu0 %v1319
    %1329 = vmatprep.subr.bf16.mxu0 0
    %1330 = vmatpush1.bf16.msra.mxu0 0
    %1331 = vmatprep.subr.bf16.mxu0 0
    %1332 = vmatpush1.bf16.msra.mxu0 0
    %1333 = vmatprep.subr.bf16.mxu0 0
    %1334 = vmatpush1.bf16.msra.mxu0 0
    %1335 = vmatprep.subr.bf16.mxu0 0
    %1336 = vmatpush1.bf16.msra.mxu0 0
    %1337 = vmatprep.subr.bf16.mxu0 0
    %1338 = vmatpush1.bf16.msra.mxu0 0
    %1339 = vmatprep.subr.bf16.mxu0 0
    %1340 = vmatpush1.bf16.msra.mxu0 0
    %1341 = vmatprep.subr.bf16.mxu0 0
    %1342 = vmatpush1.bf16.msra.mxu0 0
    %1343 = vmatprep.subr.bf16.mxu0 0
    %1344 = vmatpush1.bf16.msra.mxu0 0
    %1345 = vmatprep.subr.bf16.mxu0 0
    %1346 = vmatpush1.bf16.msra.mxu0 0
    %1347 = vmatprep.subr.bf16.mxu0 0
    %1348 = vmatpush1.bf16.msra.mxu0 0
    %1349 = vmatprep.subr.bf16.mxu0 0
    %1350 = vmatpush1.bf16.msra.mxu0 0
    %1351 = vmatprep.subr.bf16.mxu0 0
    %1352 = vmatpush1.bf16.msra.mxu0 0
    %1353 = vmatprep.subr.bf16.mxu0 0
    %1354 = vmatpush1.bf16.msra.mxu0 0
    %1355 = vmatprep.subr.bf16.mxu0 0
    %1356 = vmatpush1.bf16.msra.mxu0 0
    %1357 = vmatprep.mubr.bf16.mxu0 0
    %1358 = vmatmul.mubr.bf16.gmra.mrb[0].mxu0 %v1323
    %v1359 = vpop.f32.mrb[0].mxu0
    %v1360 = vadd.f32 %v1308, %v1359
    %v1361 = vpop.f32.mrb[0].mxu0
    %v1362 = vpop.f32.mrb[0].mxu0
    %v1363 = vadd.f32 %v1308, %v1362
    %v1364 = vpop.f32.mrb[0].mxu0
    %1365 = vdwg.mxu0
    %v1366 = vmul.f32 %v1360, 0.5
    %v1367 = vmul.f32 %v1363, 0.5
    %v1368 = vmul.f32 %v1360, 0.70710677
    %v1369 = vmul.f32 %v1363, 0.70710677
    %v1370 = vand.u32 2147483647, %v1368
    %v1371 = vand.u32 2147483647, %v1369
    %v1372 = vmul.f32 %v1370, 0.3275911
    %v1373 = vmul.f32 %v1371, 0.3275911
    %v1374 = vadd.f32 %v1372, 1.0
    %v1375 = vadd.f32 %v1373, 1.0
    %v1376 = vrcp.pop %v1374
    %v1377 = vmul.f32 1.0, %v1376
    %v1378 = vrcp.pop %v1375
    %v1379 = vmul.f32 1.0, %v1378
    %v1380 = vmul.f32 %v1377, 1.0614054
    %v1381 = vmul.f32 %v1379, 1.0614054
    %v1382 = vadd.f32 %v1380, -1.4531521
    %v1383 = vadd.f32 %v1381, -1.4531521
    %v1384 = vmul.f32 %v1377, %v1382
    %v1385 = vmul.f32 %v1379, %v1383
    %v1386 = vadd.f32 %v1384, 1.4214138
    %v1387 = vadd.f32 %v1385, 1.4214138
    %v1388 = vmul.f32 %v1377, %v1386
    %v1389 = vmul.f32 %v1379, %v1387
    %v1390 = vadd.f32 %v1388, -0.28449672
    %v1391 = vadd.f32 %v1389, -0.28449672
    %v1392 = vmul.f32 %v1377, %v1390
    %v1393 = vmul.f32 %v1379, %v1391
    %v1394 = vadd.f32 %v1392, 0.2548296
    %v1395 = vadd.f32 %v1393, 0.2548296
    %v1396 = vmul.f32 %v1377, %v1394
    %v1397 = vmul.f32 %v1379, %v1395
    %v1398 = vsub.f32 0.0, %v1368
    %v1399 = vsub.f32 0.0, %v1369
    %v1400 = vmul.f32 %v1398, %v1368
    %v1401 = vmul.f32 %v1399, %v1369
    %v1402 = vmul.f32 %v1400, 1.442695
    %v1403 = vpow.pop %v1402
    %v1404 = vmul.f32 %v1401, 1.442695
    %v1405 = vpow.pop %v1404
    %v1406 = vmul.f32 %v1396, %v1403
    %v1407 = vmul.f32 %v1397, %v1405
    %v1408 = vsub.f32 1.0, %v1406
    %v1409 = vsub.f32 1.0, %v1407
    %vm1410 = vcmp.ge.f32.partialorder %v1368, 0.0
    %vm1411 = vcmp.ge.f32.partialorder %v1369, 0.0
    %v1412 = vsub.f32 0.0, %v1408
    %v1413 = vsub.f32 0.0, %v1409
    %v1414 = vsel %vm1410, %v1408, %v1412
    %v1415 = vsel %vm1411, %v1409, %v1413
    %v1416 = vadd.f32 %v1414, 1.0
    %v1417 = vadd.f32 %v1415, 1.0
    %v1418 = vmul.f32 %v1366, %v1416
    %v1419 = vmul.f32 %v1367, %v1417
    %v1420 = vpack.c.bf16 %v1419, %v1418
    %v1421 = vlaneseq
    %v1422 = vshrl.u32 %v1421, 7
    %v1423 = vsub.s32 0, %v1422
    %v1424 = vrot.slane %v149, %v1423
    %v1433 = vunpack.c.l.b16 %v132
    %v1434 = vunpack.c.l.b16 %v133
    %v1435 = vunpack.c.l.b16 %v134
    %v1436 = vunpack.c.l.b16 %v135
    %v1437 = vunpack.c.l.b16 %v136
    %v1438 = vunpack.c.l.b16 %v137
    %v1439 = vunpack.c.l.b16 %v138
    %v1440 = vunpack.c.l.b16 %v139
    %v1441 = vpack.c.b16 %v1434, %v1433
    %v1442 = vpack.c.b16 %v1436, %v1435
    %v1443 = vpack.c.b16 %v1438, %v1437
    %v1444 = vpack.c.b16 %v1440, %v1439
    %vm1449 = vcmask 523264
    %v1451 = vsel %vm1449, %v1420, 0
    %1453 = vmatprep.subr.bf16.mxu0 0
    %1454 = vmatpush1.bf16.msra.mxu0 %v1441
    %1455 = vmatprep.subr.bf16.mxu0 0
    %1456 = vmatpush1.bf16.msra.mxu0 %v1442
    %1457 = vmatprep.subr.bf16.mxu0 0
    %1458 = vmatpush1.bf16.msra.mxu0 %v1443
    %1459 = vmatprep.subr.bf16.mxu0 0
    %1460 = vmatpush1.bf16.msra.mxu0 %v1444
    %1461 = vmatprep.subr.bf16.mxu0 0
    %1462 = vmatpush1.bf16.msra.mxu0 0
    %1463 = vmatprep.subr.bf16.mxu0 0
    %1464 = vmatpush1.bf16.msra.mxu0 0
    %1465 = vmatprep.subr.bf16.mxu0 0
    %1466 = vmatpush1.bf16.msra.mxu0 0
    %1467 = vmatprep.subr.bf16.mxu0 0
    %1468 = vmatpush1.bf16.msra.mxu0 0
    %1469 = vmatprep.subr.bf16.mxu0 0
    %1470 = vmatpush1.bf16.msra.mxu0 0
    %1471 = vmatprep.subr.bf16.mxu0 0
    %1472 = vmatpush1.bf16.msra.mxu0 0
    %1473 = vmatprep.subr.bf16.mxu0 0
    %1474 = vmatpush1.bf16.msra.mxu0 0
    %1475 = vmatprep.subr.bf16.mxu0 0
    %1476 = vmatpush1.bf16.msra.mxu0 0
    %1477 = vmatprep.subr.bf16.mxu0 0
    %1478 = vmatpush1.bf16.msra.mxu0 0
    %1479 = vmatprep.subr.bf16.mxu0 0
    %1480 = vmatpush1.bf16.msra.mxu0 0
    %1481 = vmatprep.subr.bf16.mxu0 0
    %1482 = vmatpush1.bf16.msra.mxu0 0
    %1483 = vmatprep.subr.bf16.mxu0 0
    %1484 = vmatpush1.bf16.msra.mxu0 0
    %1485 = vmatprep.mubr.bf16.mxu0 0
    %1486 = vmatmul.mubr.bf16.gmra.mrb[0].mxu0 %v1451
    %v1487 = vpop.f32.mrb[0].mxu0
    %v1488 = vadd.f32 %v1424, %v1487
    %v1489 = vpop.f32.mrb[0].mxu0
    %v1490 = vpop.f32.mrb[0].mxu0
    %v1491 = vadd.f32 %v1424, %v1490
    %v1492 = vpop.f32.mrb[0].mxu0
    %1493 = vdwg.mxu0
    %v1494 = vsub.f32 0.0, %v154
    %v1495 = vmul.f32 %v1494, 1.442695
    %v1496 = vpow.pop %v1495
    %v1497 = vadd.f32 %v1496, 1.0
    %v1498 = vrcp.pop %v1497
    %v1499 = vmul.f32 %v154, %v1498
    %v1500 = vpack.c.bf16 %v1499, %v1499
    %v1502 = vlaneseq
    %v1503 = vshrl.u32 %v1502, 7
    %v1504 = vsub.s32 0, %v1503
    %v1505 = vrot.slane %v144, %v1504
    %v1511 = vunpack.c.l.b16 %v140
    %v1512 = vunpack.c.l.b16 %v141
    %v1513 = vunpack.c.l.b16 %v142
    %v1514 = vunpack.c.l.b16 %v143
    %v1515 = vpack.c.b16 %v1512, %v1511
    %v1516 = vpack.c.b16 %v1514, %v1513
    %v1520 = vsel %vm167, %v1500, 0
    %1522 = vmatprep.subr.bf16.mxu0 0
    %1523 = vmatpush1.bf16.msra.mxu0 %v1515
    %1524 = vmatprep.subr.bf16.mxu0 0
    %1525 = vmatpush1.bf16.msra.mxu0 %v1516
    %1526 = vmatprep.subr.bf16.mxu0 0
    %1527 = vmatpush1.bf16.msra.mxu0 0
    %1528 = vmatprep.subr.bf16.mxu0 0
    %1529 = vmatpush1.bf16.msra.mxu0 0
    %1530 = vmatprep.subr.bf16.mxu0 0
    %1531 = vmatpush1.bf16.msra.mxu0 0
    %1532 = vmatprep.subr.bf16.mxu0 0
    %1533 = vmatpush1.bf16.msra.mxu0 0
    %1534 = vmatprep.subr.bf16.mxu0 0
    %1535 = vmatpush1.bf16.msra.mxu0 0
    %1536 = vmatprep.subr.bf16.mxu0 0
    %1537 = vmatpush1.bf16.msra.mxu0 0
    %1538 = vmatprep.subr.bf16.mxu0 0
    %1539 = vmatpush1.bf16.msra.mxu0 0
    %1540 = vmatprep.subr.bf16.mxu0 0
    %1541 = vmatpush1.bf16.msra.mxu0 0
    %1542 = vmatprep.subr.bf16.mxu0 0
    %1543 = vmatpush1.bf16.msra.mxu0 0
    %1544 = vmatprep.subr.bf16.mxu0 0
    %1545 = vmatpush1.bf16.msra.mxu0 0
    %1546 = vmatprep.subr.bf16.mxu0 0
    %1547 = vmatpush1.bf16.msra.mxu0 0
    %1548 = vmatprep.subr.bf16.mxu0 0
    %1549 = vmatpush1.bf16.msra.mxu0 0
    %1550 = vmatprep.subr.bf16.mxu0 0
    %1551 = vmatpush1.bf16.msra.mxu0 0
    %1552 = vmatprep.subr.bf16.mxu0 0
    %1553 = vmatpush1.bf16.msra.mxu0 0
    %1554 = vmatprep.mubr.bf16.mxu0 0
    %1555 = vmatmul.mubr.bf16.gmra.mrb[0].mxu0 %v1520
    %v1556 = vpop.f32.mrb[0].mxu0
    %v1557 = vadd.f32 %v1505, %v1556
    %v1558 = vpop.f32.mrb[0].mxu0
    %v1559 = vpop.f32.mrb[0].mxu0
    %v1560 = vpop.f32.mrb[0].mxu0
    %1561 = vdwg.mxu0
    %v1564 = vunpack.c.l.s4 1966171168
    %v1565 = vunpack.c.0.s8 %v1564
    %v1566 = vlaneseq
    %v1567 = vshrl.u32 %v1566, 7
    %v1568 = vsub.s32 %v1565, %v1567
    %v1569 = vrot.slane %v1557, %v1568
    %v1570 = vcombine.high %v1569, %v1569
    %v1572 = vunpack.c.l.s4 1966171168
    %v1573 = vunpack.c.0.s8 %v1572
    %v1574 = vlaneseq
    %v1575 = vshrl.u32 %v1574, 7
    %v1576 = vsub.s32 %v1573, %v1575
    %v1577 = vrot.slane %v1569, %v1576
    %v1579 = vunpack.c.l.s4 1966171168
    %v1580 = vunpack.c.0.s8 %v1579
    %v1581 = vlaneseq
    %v1582 = vshrl.u32 %v1581, 7
    %v1583 = vsub.s32 %v1580, %v1582
    %v1584 = vrot.slane %v1570, %v1583
    %v1587 = vsel %vm167, %v1488, 0.0
    %1588 = vadd.xlane.f32.xlu0 %v1587
    %v1589 = vpop.xlane.xlu0 %1588
    %v1590 = vsel %vm167, %v1491, 0.0
    %1591 = vadd.xlane.f32.xlu0 %v1590
    %v1592 = vpop.xlane.xlu0 %1591
    %v1593 = vmul.f32 %v1589, %v174
    %v1594 = vmul.f32 %v1592, %v174
    %v1595 = vsub.f32 %v1488, %v1593
    %v1596 = vsub.f32 %v1491, %v1594
    %v1597 = vmul.f32 %v1595, %v1595
    %v1598 = vmul.f32 %v1596, %v1596
    %v1599 = vsel %vm167, %v1597, 0.0
    %1600 = vadd.xlane.f32.xlu0 %v1599
    %v1601 = vpop.xlane.xlu0 %1600
    %v1602 = vsel %vm167, %v1598, 0.0
    %1603 = vadd.xlane.f32.xlu0 %v1602
    %v1604 = vpop.xlane.xlu0 %1603
    %v1605 = vmul.f32 %v1601, %v174
    %v1606 = vmul.f32 %v1604, %v174
    %v1607 = vadd.f32 %v1605, 1e-05
    %v1608 = vadd.f32 %v1606, 1e-05
    %v1609 = vrsqrt.pop %v1607
    %v1610 = vrsqrt.pop %v1608
    %v1611 = vmul.f32 %v1595, %v1609
    %v1612 = vmul.f32 %v1596, %v1610
    %v1613 = vlaneseq
    %v1614 = vshrl.u32 %v1613, 7
    %v1615 = vsub.s32 2, %v1614
    %v1616 = vrot.slane %v122, %v1615
    %v1617 = vmul.f32 %v1611, %v1616
    %v1618 = vmul.f32 %v1612, %v1616
    %v1619 = vlaneseq
    %v1620 = vshrl.u32 %v1619, 7
    %v1621 = vsub.s32 3, %v1620
    %v1622 = vrot.slane %v122, %v1621
    %v1623 = vadd.f32 %v1617, %v1622
    %v1624 = vadd.f32 %v1618, %v1622
    %v1625 = vadd.f32 %v1577, 1.0
    %v1626 = vadd.f32 %v1584, 1.0
    %v1629 = vlaneseq
    %v1630 = vshrl.u32 %v1629, 7
    %v1631 = vsub.s32 0, %v1630
    %v1632 = vrot.slane %v1625, %v1631
    %v1633 = vlaneseq
    %v1634 = vshrl.u32 %v1633, 7
    %v1635 = vsub.s32 0, %v1634
    %v1636 = vrot.slane %v1626, %v1635
    %v1639 = vmul.f32 %v1623, %v1632
    %v1640 = vmul.f32 %v1624, %v1636
    %v1641 = vlaneseq
    %v1642 = vshrl.u32 %v1641, 7
    %v1643 = vsub.s32 0, %v1642
    %v1644 = vrot.slane %v1577, %v1643
    %v1645 = vlaneseq
    %v1646 = vshrl.u32 %v1645, 7
    %v1647 = vsub.s32 0, %v1646
    %v1648 = vrot.slane %v1584, %v1647
    %1649 = vrot.lane.b32.xlu0 %v1644, 96
    %v1650 = vpop.permute.xlu0 %1649
    %1651 = vrot.lane.b32.xlu0 %v1648, 96
    %v1652 = vpop.permute.xlu0 %1651
    %v1655 = vadd.f32 %v1639, %v1650
    %v1656 = vadd.f32 %v1640, %v1652
    %v1657 = vsub.f32 0.0, %v1655
    %v1658 = vsub.f32 0.0, %v1656
    %v1659 = vmul.f32 %v1657, 1.442695
    %v1660 = vpow.pop %v1659
    %v1661 = vmul.f32 %v1658, 1.442695
    %v1662 = vpow.pop %v1661
    %v1663 = vadd.f32 %v1660, 1.0
    %v1664 = vadd.f32 %v1662, 1.0
    %v1665 = vrcp.pop %v1663
    %v1666 = vmul.f32 %v1655, %v1665
    %v1667 = vrcp.pop %v1664
    %v1668 = vmul.f32 %v1656, %v1667
    %v1669 = vpack.c.bf16 %v1668, %v1666
    %v1670 = vlaneseq
    %v1671 = vshrl.u32 %v1670, 7
    %v1672 = vsub.s32 1, %v1671
    %v1673 = vrot.slane %v149, %v1672
    %v1678 = vunpack.c.l.b16 %v145
    %v1679 = vunpack.c.l.b16 %v146
    %v1680 = vunpack.c.l.b16 %v147
    %v1681 = vunpack.c.l.b16 %v148
    %v1682 = vpack.c.b16 %v1679, %v1678
    %v1683 = vpack.c.b16 %v1681, %v1680
    %v1687 = vsel %vm167, %v1669, 0
    %1689 = vmatprep.subr.bf16.mxu0 0
    %1690 = vmatpush1.bf16.msra.mxu0 %v1682
    %1691 = vmatprep.subr.bf16.mxu0 0
    %1692 = vmatpush1.bf16.msra.mxu0 %v1683
    %1693 = vmatprep.subr.bf16.mxu0 0
    %1694 = vmatpush1.bf16.msra.mxu0 0
    %1695 = vmatprep.subr.bf16.mxu0 0
    %1696 = vmatpush1.bf16.msra.mxu0 0
    %1697 = vmatprep.subr.bf16.mxu0 0
    %1698 = vmatpush1.bf16.msra.mxu0 0
    %1699 = vmatprep.subr.bf16.mxu0 0
    %1700 = vmatpush1.bf16.msra.mxu0 0
    %1701 = vmatprep.subr.bf16.mxu0 0
    %1702 = vmatpush1.bf16.msra.mxu0 0
    %1703 = vmatprep.subr.bf16.mxu0 0
    %1704 = vmatpush1.bf16.msra.mxu0 0
    %1705 = vmatprep.subr.bf16.mxu0 0
    %1706 = vmatpush1.bf16.msra.mxu0 0
    %1707 = vmatprep.subr.bf16.mxu0 0
    %1708 = vmatpush1.bf16.msra.mxu0 0
    %1709 = vmatprep.subr.bf16.mxu0 0
    %1710 = vmatpush1.bf16.msra.mxu0 0
    %1711 = vmatprep.subr.bf16.mxu0 0
    %1712 = vmatpush1.bf16.msra.mxu0 0
    %1713 = vmatprep.subr.bf16.mxu0 0
    %1714 = vmatpush1.bf16.msra.mxu0 0
    %1715 = vmatprep.subr.bf16.mxu0 0
    %1716 = vmatpush1.bf16.msra.mxu0 0
    %1717 = vmatprep.subr.bf16.mxu0 0
    %1718 = vmatpush1.bf16.msra.mxu0 0
    %1719 = vmatprep.subr.bf16.mxu0 0
    %1720 = vmatpush1.bf16.msra.mxu0 0
    %1721 = vmatprep.mubr.bf16.mxu0 0
    %1722 = vmatmul.mubr.bf16.gmra.mrb[0].mxu0 %v1687
    %v1723 = vpop.f32.mrb[0].mxu0
    %v1724 = vadd.f32 %v1673, %v1723
    %v1725 = vpop.f32.mrb[0].mxu0
    %v1726 = vpop.f32.mrb[0].mxu0
    %v1727 = vadd.f32 %v1673, %v1726
    %v1728 = vpop.f32.mrb[0].mxu0
    %1729 = vdwg.mxu0
    %v1730 = vadd.f32 %v1301, %v1724
    %v1731 = vadd.f32 %v1302, %v1727
    %v1732 = vadd.f32 %v1301, %v1730
    %v1733 = vadd.f32 %v1302, %v1731
    %v1734 = vsel %vm167, %v1732, 0.0
    %1735 = vadd.xlane.f32.xlu0 %v1734
    %v1736 = vpop.xlane.xlu0 %1735
    %v1737 = vsel %vm167, %v1733, 0.0
    %1738 = vadd.xlane.f32.xlu0 %v1737
    %v1739 = vpop.xlane.xlu0 %1738
    %v1740 = vmul.f32 %v1736, %v174
    %v1741 = vmul.f32 %v1739, %v174
    %v1742 = vsub.f32 %v1732, %v1740
    %v1743 = vsub.f32 %v1733, %v1741
    %v1744 = vmul.f32 %v1742, %v1742
    %v1745 = vmul.f32 %v1743, %v1743
    %v1746 = vsel %vm167, %v1744, 0.0
    %1747 = vadd.xlane.f32.xlu0 %v1746
    %v1748 = vpop.xlane.xlu0 %1747
    %v1749 = vsel %vm167, %v1745, 0.0
    %1750 = vadd.xlane.f32.xlu0 %v1749
    %v1751 = vpop.xlane.xlu0 %1750
    %v1752 = vmul.f32 %v1748, %v174
    %v1753 = vmul.f32 %v1751, %v174
    %v1754 = vadd.f32 %v1752, 1e-05
    %v1755 = vadd.f32 %v1753, 1e-05
    %v1756 = vrsqrt.pop %v1754
    %v1757 = vrsqrt.pop %v1755
    %v1758 = vmul.f32 %v1742, %v1756
    %v1759 = vmul.f32 %v1743, %v1757
    %v1760 = vlaneseq
    %v1761 = vshrl.u32 %v1760, 7
    %v1762 = vsub.s32 0, %v1761
    %v1763 = vrot.slane %v122, %v1762
    %v1764 = vmul.f32 %v1758, %v1763
    %v1765 = vmul.f32 %v1759, %v1763
    %v1766 = vlaneseq
    %v1767 = vshrl.u32 %v1766, 7
    %v1768 = vsub.s32 1, %v1767
    %v1769 = vrot.slane %v122, %v1768
    %v1770 = vadd.f32 %v1764, %v1769
    %v1771 = vadd.f32 %v1765, %v1769
    %1772 = vst.msk [vmem:[#allocation13] sm:$0xff] %vm167, %v1770
    %1773 = vst.msk [vmem:[#allocation13 + $0x8] sm:$0xff] %vm167, %v1771
    // Predicated region
    $region74: #{tpu_custom_call.1} parent=1 // pred_check
      _
    $region75: #{tpu_custom_call.1} parent=1 // pred_check_branch
      %1775 = sbr.rel (0) target = $region77
    $region76: #{tpu_custom_call.1} parent=1 // pred_region
      %s1777 = ssub.s32 256, 256
      %1778 = vsyncadd [#allocation4], %s1777
      %s1779 = sshll.u32 [#allocation13], 4
      %s1780 = int_to_ptr.vmem [resolvable:$true] %s1779
      %1785 = dma.vmem_to_hbm [thread:$0]  %s1780, 256, %s12, [#allocation4], 128, 128, 8
    $region77: #{tpu_custom_call.1} parent=1 // pred_fallthru
      _
    // Predicated region
    $region78: #{tpu_custom_call.1} parent=1 // pred_check
      _
    $region79: #{tpu_custom_call.1} parent=1 // pred_check_branch
      %1787 = sbr.rel (0) target = $region81
    $region80: #{tpu_custom_call.1} parent=1 // pred_region
      %1788 = dma.done [#allocation4], 256
    $region81: #{tpu_custom_call.1} parent=1 // pred_fallthru
      _
    %1789 = vsyncpa [#allocation3], 1
    %1790 = vsyncpa [#allocation6], 1
    %1791 = vsyncpa [#allocation9], 1
    %1792 = vsyncpa [#allocation12], 1
    %1793 = vsyncpa [#allocation4], 1

</llo_original>
